<compile_context>
chip_gen: v7x
topology: tpu7x:2x2x1
jax: 0.10.0
libtpu: 0.0.40
codegen_flags: <defaults>
</compile_context>

<pallas_src>
import functools
import math

import jax
import jax.numpy as jnp
from jax.experimental import pallas as pl
from jax.experimental.pallas import tpu as pltpu


def _layer_norm(v, a, b, d, eps):
    # Matches PyTorch: mean over last dim; std with unbiased=True (divide by D-1);
    # eps added to the std (not the variance).
    mean = jnp.mean(v, axis=-1, keepdims=True)
    var = jnp.sum((v - mean) ** 2, axis=-1, keepdims=True) * (1.0 / (d - 1))
    inv_std = pl.reciprocal(jnp.sqrt(var) + eps, approx=True)
    return a * (v - mean) * inv_std + b


def encoder_layer_kernel(
    x_ref, mask_ref,
    wqkv_ref, bqkv_ref, wo_ref, bo_ref,
    w1_ref, b1_ref, w2_ref, b2_ref,
    ln1a_ref, ln1b_ref, ln2a_ref, ln2b_ref,
    o_ref,
    attn_scr,
    *, bt, seq, d_model, n_heads, eps, compute_dtype):
    d_k = d_model // n_heads
    rows = bt * seq
    cdt = compute_dtype

    x = x_ref[...].reshape(rows, d_model).astype(jnp.float32)   # (Bt*S, D)
    # Additive mask bias, computed once per grid step (hoisted out of the head loop).
    bias = jnp.where(mask_ref[...] == 0, jnp.float32(-1e9), jnp.float32(0.0))  # (Bt,1,S)

    # ---------------- sublayer 0: self-attention ----------------
    xn = _layer_norm(x, ln1a_ref[...], ln1b_ref[...], d_model, eps)

    # Fused QKV projection: one (Bt*S, D) x (D, 3D) GEMM, bf16 in / f32 accumulate.
    qkv = jnp.dot(xn.astype(cdt), wqkv_ref[...],
                  preferred_element_type=jnp.float32) + bqkv_ref[...]
    q = qkv[:, :d_model].reshape(bt, seq, d_model)
    k = qkv[:, d_model:2 * d_model].reshape(bt, seq, d_model)
    v = qkv[:, 2 * d_model:].reshape(bt, seq, d_model)

    inv_sqrt_dk = 1.0 / math.sqrt(d_k)
    for h in range(n_heads):                                   # static loop over heads
        lo = h * d_k
        qh = q[:, :, lo:lo + d_k].astype(cdt)                  # (Bt, S, d_k)
        kh = k[:, :, lo:lo + d_k].astype(cdt)
        vh = v[:, :, lo:lo + d_k].astype(cdt)
        # Batched over Bt; contracts d_k of both operands directly (no kh.T).
        s = jnp.einsum("bqd,bkd->bqk", qh, kh,
                       preferred_element_type=jnp.float32) * inv_sqrt_dk
        s = s + bias                                           # (Bt,1,S) broadcasts over queries
        m = jnp.max(s, axis=-1, keepdims=True)
        e = jnp.exp(s - m)
        p = e * pl.reciprocal(jnp.sum(e, axis=-1, keepdims=True), approx=True)
        ctx = jnp.einsum("bqk,bkd->bqd", p.astype(cdt), vh,
                         preferred_element_type=jnp.float32)   # (Bt, S, d_k)
        # Write this head's context into its column slice of the VMEM scratch
        # (replaces the lane-axis concatenate of the previous version).
        attn_scr[:, lo:lo + d_k] = ctx.reshape(rows, d_k)

    attn = jnp.dot(attn_scr[...].astype(cdt), wo_ref[...],
                   preferred_element_type=jnp.float32) + bo_ref[...]
    x1 = x + attn                                              # residual (dropout == identity)

    # ---------------- sublayer 1: feed-forward ----------------
    xn2 = _layer_norm(x1, ln2a_ref[...], ln2b_ref[...], d_model, eps)
    h1 = jnp.maximum(
        jnp.dot(xn2.astype(cdt), w1_ref[...],
                preferred_element_type=jnp.float32) + b1_ref[...], 0.0)
    ff = jnp.dot(h1.astype(cdt), w2_ref[...],
                 preferred_element_type=jnp.float32) + b2_ref[...]

    o_ref[...] = (x1 + ff).reshape(bt, seq, d_model).astype(o_ref.dtype)


def encoder_layer_forward(x, mask, params, *, n_heads, eps=1e-6,
                          compute_dtype=jnp.bfloat16):
    B, S, D = x.shape
    d_ff = params["w1"].shape[1]

    # Pick how many batch elements each grid step processes: largest divisor of B
    # that keeps the per-step GEMM row count (Bt*S) within a reasonable VMEM budget.
    bt = 1
    for d in range(1, B + 1):
        if B % d == 0 and d * S <= 1024:
            bt = d
    grid = (B // bt,)

    # Fuse Q/K/V weights into a single (D, 3D) projection; cast GEMM weights to the
    # compute dtype once on the host (in production this is precomputed once).
    wqkv = jnp.concatenate([params["wq"], params["wk"], params["wv"]],
                           axis=1).astype(compute_dtype)
    bqkv = jnp.concatenate([params["bq"], params["bk"], params["bv"]],
                           axis=1).astype(jnp.float32)
    wo = params["wo"].astype(compute_dtype)
    w1 = params["w1"].astype(compute_dtype)
    w2 = params["w2"].astype(compute_dtype)

    kern = functools.partial(
        encoder_layer_kernel, bt=bt, seq=S, d_model=D, n_heads=n_heads,
        eps=eps, compute_dtype=compute_dtype)

    # Weights / biases: constant index_map -> same block every step, no re-DMA.
    def const(shape):
        return pl.BlockSpec(shape, lambda b: (0,) * len(shape))

    in_specs = [
        pl.BlockSpec((bt, S, D), lambda b: (b, 0, 0)),   # x
        pl.BlockSpec((bt, 1, S), lambda b: (b, 0, 0)),   # mask
        const((D, 3 * D)), const((1, 3 * D)),            # wqkv, bqkv
        const((D, D)), const((1, D)),                    # wo, bo
        const((D, d_ff)), const((1, d_ff)),              # w1, b1
        const((d_ff, D)), const((1, D)),                 # w2, b2
        const((1, D)), const((1, D)),                    # ln1 a, b
        const((1, D)), const((1, D)),                    # ln2 a, b
    ]

    return pl.pallas_call(
        kern,
        out_shape=jax.ShapeDtypeStruct((B, S, D), x.dtype),
        grid_spec=pltpu.PrefetchScalarGridSpec(
            num_scalar_prefetch=0,
            grid=grid,
            in_specs=in_specs,
            out_specs=pl.BlockSpec((bt, S, D), lambda b: (b, 0, 0)),
            scratch_shapes=[pltpu.VMEM((bt * S, D), jnp.float32)],
        ),
        compiler_params=pltpu.CompilerParams(
            dimension_semantics=("parallel",),
            vmem_limit_bytes=48 * 1024 * 1024,
        ),
    )(
        x, mask,
        wqkv, bqkv, wo, params["bo"], w1, params["b1"], w2, params["b2"],
        params["ln1_a"], params["ln1_b"], params["ln2_a"], params["ln2_b"],
    )


# ---------------- pure-JAX reference (f32, for correctness check) ----------------
def _ref_forward(x, mask, p, n_heads, eps=1e-6):
    B, S, D = x.shape
    d_k = D // n_heads

    def ln(v, a, b):
        mean = jnp.mean(v, axis=-1, keepdims=True)
        var = jnp.sum((v - mean) ** 2, axis=-1, keepdims=True) / (D - 1)
        return a * (v - mean) / (jnp.sqrt(var) + eps) + b

    xn = ln(x, p["ln1_a"][0], p["ln1_b"][0])
    q = xn @ p["wq"] + p["bq"][0]
    k = xn @ p["wk"] + p["bk"][0]
    v = xn @ p["wv"] + p["bv"][0]
    qh = q.reshape(B, S, n_heads, d_k).transpose(0, 2, 1, 3)
    kh = k.reshape(B, S, n_heads, d_k).transpose(0, 2, 1, 3)
    vh = v.reshape(B, S, n_heads, d_k).transpose(0, 2, 1, 3)
    scores = jnp.einsum("bhqd,bhkd->bhqk", qh, kh) / math.sqrt(d_k)
    scores = jnp.where(mask[:, None, :, :] == 0, -1e9, scores)
    pattn = jax.nn.softmax(scores, axis=-1)
    attn = jnp.einsum("bhqk,bhkd->bhqd", pattn, vh)
    attn = attn.transpose(0, 2, 1, 3).reshape(B, S, D)
    x1 = x + (attn @ p["wo"] + p["bo"][0])

    xn2 = ln(x1, p["ln2_a"][0], p["ln2_b"][0])
    ff = jnp.maximum(xn2 @ p["w1"] + p["b1"][0], 0.0) @ p["w2"] + p["b2"][0]
    return x1 + ff


if __name__ == "__main__":
    B, S, D, H, D_FF = 2, 8, 32, 4, 64

    key = jax.random.PRNGKey(0)
    ks = jax.random.split(key, 12)

    def w(k, shape, scale=0.05):
        return (scale * jax.random.normal(k, shape)).astype(jnp.float32)

    params = {
        "wq": w(ks[0], (D, D)), "bq": w(ks[1], (1, D)),
        "wk": w(ks[2], (D, D)), "bk": w(ks[3], (1, D)),
        "wv": w(ks[4], (D, D)), "bv": w(ks[5], (1, D)),
        "wo": w(ks[6], (D, D)), "bo": w(ks[7], (1, D)),
        "w1": w(ks[8], (D, D_FF)), "b1": w(ks[9], (1, D_FF)),
        "w2": w(ks[10], (D_FF, D)), "b2": jnp.zeros((1, D), jnp.float32),
        "ln1_a": jnp.ones((1, D), jnp.float32), "ln1_b": jnp.zeros((1, D), jnp.float32),
        "ln2_a": jnp.ones((1, D), jnp.float32), "ln2_b": jnp.zeros((1, D), jnp.float32),
    }

    x = jax.random.normal(jax.random.PRNGKey(1), (B, S, D), jnp.float32)
    # padding mask: batch 0 keeps all positions, batch 1 masks the last 2 keys
    mask = jnp.ones((B, 1, S), jnp.int32)
    mask = mask.at[1, 0, -2:].set(0)

    out = encoder_layer_forward(x, mask, params, n_heads=H)
    out = jax.block_until_ready(out)

    ref = _ref_forward(x, mask, params, n_heads=H)
    assert out.shape == (B, S, D)
    # Tolerance loosened (vs. pure-f32) because GEMMs run with bf16 inputs
    # (f32 accumulation) and LN/softmax use the approximate EUP reciprocal.
    assert jnp.allclose(out, ref, atol=2e-2, rtol=2e-2), "mismatch vs pure-JAX reference"

    print("KERNEL_OK")
</pallas_src>

<mosaic_0001>
module attributes {stable_mosaic.version = 11 : i64} {
  func.func @encoder_layer_kernel(%arg0: i32, %arg1: memref<2x8x32xf32, #tpu.memory_space<vmem>>, %arg2: memref<2x1x8xi32, #tpu.memory_space<vmem>>, %arg3: memref<32x96xbf16, #tpu.memory_space<vmem>>, %arg4: memref<1x96xf32, #tpu.memory_space<vmem>>, %arg5: memref<32x32xbf16, #tpu.memory_space<vmem>>, %arg6: memref<1x32xf32, #tpu.memory_space<vmem>>, %arg7: memref<32x64xbf16, #tpu.memory_space<vmem>>, %arg8: memref<1x64xf32, #tpu.memory_space<vmem>>, %arg9: memref<64x32xbf16, #tpu.memory_space<vmem>>, %arg10: memref<1x32xf32, #tpu.memory_space<vmem>>, %arg11: memref<1x32xf32, #tpu.memory_space<vmem>>, %arg12: memref<1x32xf32, #tpu.memory_space<vmem>>, %arg13: memref<1x32xf32, #tpu.memory_space<vmem>>, %arg14: memref<1x32xf32, #tpu.memory_space<vmem>>, %arg15: memref<2x8x32xf32, #tpu.memory_space<vmem>>, %arg16: memref<16x32xf32, #tpu.memory_space<vmem>>) attributes {dimension_semantics = [#tpu.dimension_semantics<parallel>], iteration_bounds = array<i64: 1>, scalar_prefetch = 0 : i64, scratch_operands = 1 : i64, tpu.core_type = #tpu.core_type<tc>, window_params = [{transform_indices = @transform_0, window_bounds = array<i64: 2, 8, 32>}, {transform_indices = @transform_1, window_bounds = array<i64: 2, 1, 8>}, {pipeline_mode = #tpu.pipeline_mode<synchronous>, transform_indices = @transform_2, window_bounds = array<i64: 32, 96>}, {pipeline_mode = #tpu.pipeline_mode<synchronous>, transform_indices = @transform_3, window_bounds = array<i64: 1, 96>}, {pipeline_mode = #tpu.pipeline_mode<synchronous>, transform_indices = @transform_4, window_bounds = array<i64: 32, 32>}, {pipeline_mode = #tpu.pipeline_mode<synchronous>, transform_indices = @transform_5, window_bounds = array<i64: 1, 32>}, {pipeline_mode = #tpu.pipeline_mode<synchronous>, transform_indices = @transform_6, window_bounds = array<i64: 32, 64>}, {pipeline_mode = #tpu.pipeline_mode<synchronous>, transform_indices = @transform_7, window_bounds = array<i64: 1, 64>}, {pipeline_mode = #tpu.pipeline_mode<synchronous>, transform_indices = @transform_8, window_bounds = array<i64: 64, 32>}, {pipeline_mode = #tpu.pipeline_mode<synchronous>, transform_indices = @transform_9, window_bounds = array<i64: 1, 32>}, {pipeline_mode = #tpu.pipeline_mode<synchronous>, transform_indices = @transform_10, window_bounds = array<i64: 1, 32>}, {pipeline_mode = #tpu.pipeline_mode<synchronous>, transform_indices = @transform_11, window_bounds = array<i64: 1, 32>}, {pipeline_mode = #tpu.pipeline_mode<synchronous>, transform_indices = @transform_12, window_bounds = array<i64: 1, 32>}, {pipeline_mode = #tpu.pipeline_mode<synchronous>, transform_indices = @transform_13, window_bounds = array<i64: 1, 32>}, {transform_indices = @transform_14, window_bounds = array<i64: 2, 8, 32>}]} {
    %c0 = arith.constant 0 : index
    %c0_0 = arith.constant 0 : index
    %c0_1 = arith.constant 0 : index
    %0 = vector.load %arg1[%c0, %c0_0, %c0_1] : memref<2x8x32xf32, #tpu.memory_space<vmem>>, vector<2x8x32xf32>
    %1 = vector.shape_cast %0 : vector<2x8x32xf32> to vector<16x32xf32>
    %c0_2 = arith.constant 0 : index
    %c0_3 = arith.constant 0 : index
    %c0_4 = arith.constant 0 : index
    %2 = vector.load %arg2[%c0_2, %c0_3, %c0_4] : memref<2x1x8xi32, #tpu.memory_space<vmem>>, vector<2x1x8xi32>
    %c0_i32 = arith.constant 0 : i32
    %3 = vector.broadcast %c0_i32 : i32 to vector<2x1x8xi32>
    %4 = arith.cmpi eq, %2, %3 : vector<2x1x8xi32>
    %cst = arith.constant -1.000000e+09 : f32
    %cst_5 = arith.constant 0.000000e+00 : f32
    %5 = vector.broadcast %cst : f32 to vector<2x1x8xf32>
    %6 = vector.broadcast %cst_5 : f32 to vector<2x1x8xf32>
    %7 = arith.select %4, %5, %6 : vector<2x1x8xi1>, vector<2x1x8xf32>
    %c0_6 = arith.constant 0 : index
    %c0_7 = arith.constant 0 : index
    %8 = vector.load %arg11[%c0_6, %c0_7] : memref<1x32xf32, #tpu.memory_space<vmem>>, vector<1x32xf32>
    %c0_8 = arith.constant 0 : index
    %c0_9 = arith.constant 0 : index
    %9 = vector.load %arg12[%c0_8, %c0_9] : memref<1x32xf32, #tpu.memory_space<vmem>>, vector<1x32xf32>
    %cst_10 = arith.constant dense<0.000000e+00> : vector<16xf32>
    %10 = vector.multi_reduction <add>, %1, %cst_10 [1] : vector<16x32xf32> to vector<16xf32>
    %11 = vector.shape_cast %10 : vector<16xf32> to vector<16x1xf32>
    %cst_11 = arith.constant 3.200000e+01 : f32
    %12 = vector.broadcast %cst_11 : f32 to vector<16x1xf32>
    %13 = arith.divf %11, %12 : vector<16x1xf32>
    %14 = vector.broadcast %13 : vector<16x1xf32> to vector<16x32xf32>
    %15 = arith.subf %1, %14 : vector<16x32xf32>
    %16 = arith.mulf %15, %15 : vector<16x32xf32>
    %cst_12 = arith.constant dense<0.000000e+00> : vector<16xf32>
    %17 = vector.multi_reduction <add>, %16, %cst_12 [1] : vector<16x32xf32> to vector<16xf32>
    %18 = vector.shape_cast %17 : vector<16xf32> to vector<16x1xf32>
    %cst_13 = arith.constant 0.0322580636 : f32
    %19 = vector.broadcast %cst_13 : f32 to vector<16x1xf32>
    %20 = arith.mulf %18, %19 : vector<16x1xf32>
    %21 = math.sqrt %20 : vector<16x1xf32>
    %cst_14 = arith.constant 9.99999997E-7 : f32
    %22 = vector.broadcast %cst_14 : f32 to vector<16x1xf32>
    %23 = arith.addf %21, %22 : vector<16x1xf32>
    %24 = tpu.reciprocal %23 {approx = true} : vector<16x1xf32> -> vector<16x1xf32>
    %25 = vector.broadcast %13 : vector<16x1xf32> to vector<16x32xf32>
    %26 = arith.subf %1, %25 : vector<16x32xf32>
    %27 = vector.broadcast %8 : vector<1x32xf32> to vector<16x32xf32>
    %28 = arith.mulf %27, %26 : vector<16x32xf32>
    %29 = vector.broadcast %24 : vector<16x1xf32> to vector<16x32xf32>
    %30 = arith.mulf %28, %29 : vector<16x32xf32>
    %31 = vector.broadcast %9 : vector<1x32xf32> to vector<16x32xf32>
    %32 = arith.addf %30, %31 : vector<16x32xf32>
    %33 = arith.truncf %32 : vector<16x32xf32> to vector<16x32xbf16>
    %c0_15 = arith.constant 0 : index
    %c0_16 = arith.constant 0 : index
    %34 = vector.load %arg3[%c0_15, %c0_16] : memref<32x96xbf16, #tpu.memory_space<vmem>>, vector<32x96xbf16>
    %cst_17 = arith.constant dense<0.000000e+00> : vector<16x96xf32>
    %35 = tpu.matmul %33, %34, %cst_17 {dimension_numbers = #tpu.dot_dimension_numbers<[1], [0], [0], [1], [0, 0, 1, 1], [], []>} : vector<16x32xbf16>, vector<32x96xbf16>, vector<16x96xf32> -> vector<16x96xf32>
    %c0_18 = arith.constant 0 : index
    %c0_19 = arith.constant 0 : index
    %36 = vector.load %arg4[%c0_18, %c0_19] : memref<1x96xf32, #tpu.memory_space<vmem>>, vector<1x96xf32>
    %37 = vector.broadcast %36 : vector<1x96xf32> to vector<16x96xf32>
    %38 = arith.addf %35, %37 : vector<16x96xf32>
    %39 = vector.extract_strided_slice %38 {offsets = [0, 0], sizes = [16, 32], strides = [1, 1]} : vector<16x96xf32> to vector<16x32xf32>
    %40 = vector.shape_cast %39 : vector<16x32xf32> to vector<2x8x32xf32>
    %41 = vector.extract_strided_slice %38 {offsets = [0, 32], sizes = [16, 32], strides = [1, 1]} : vector<16x96xf32> to vector<16x32xf32>
    %42 = vector.shape_cast %41 : vector<16x32xf32> to vector<2x8x32xf32>
    %43 = vector.extract_strided_slice %38 {offsets = [0, 64], sizes = [16, 32], strides = [1, 1]} : vector<16x96xf32> to vector<16x32xf32>
    %44 = vector.shape_cast %43 : vector<16x32xf32> to vector<2x8x32xf32>
    %45 = vector.extract_strided_slice %40 {offsets = [0, 0, 0], sizes = [2, 8, 8], strides = [1, 1, 1]} : vector<2x8x32xf32> to vector<2x8x8xf32>
    %46 = arith.truncf %45 : vector<2x8x8xf32> to vector<2x8x8xbf16>
    %47 = vector.extract_strided_slice %42 {offsets = [0, 0, 0], sizes = [2, 8, 8], strides = [1, 1, 1]} : vector<2x8x32xf32> to vector<2x8x8xf32>
    %48 = arith.truncf %47 : vector<2x8x8xf32> to vector<2x8x8xbf16>
    %49 = vector.extract_strided_slice %44 {offsets = [0, 0, 0], sizes = [2, 8, 8], strides = [1, 1, 1]} : vector<2x8x32xf32> to vector<2x8x8xf32>
    %50 = arith.truncf %49 : vector<2x8x8xf32> to vector<2x8x8xbf16>
    "tpu.trace_start"() <{level = 10 : i32, message = "bqd,bkd->bqk"}> : () -> ()
    %cst_20 = arith.constant dense<0.000000e+00> : vector<2x8x8xf32>
    %51 = tpu.matmul %46, %48, %cst_20 {dimension_numbers = #tpu.dot_dimension_numbers<[2], [2], [1], [1], [0, 0, 0, 1, 1, 1], [0], [0]>} : vector<2x8x8xbf16>, vector<2x8x8xbf16>, vector<2x8x8xf32> -> vector<2x8x8xf32>
    "tpu.trace_stop"() : () -> ()
    %cst_21 = arith.constant 0.353553385 : f32
    %52 = vector.broadcast %cst_21 : f32 to vector<2x8x8xf32>
    %53 = arith.mulf %51, %52 : vector<2x8x8xf32>
    %54 = vector.broadcast %7 : vector<2x1x8xf32> to vector<2x8x8xf32>
    %55 = arith.addf %53, %54 : vector<2x8x8xf32>
    %cst_22 = arith.constant dense<0xFF800000> : vector<2x8xf32>
    %56 = vector.multi_reduction <maximumf>, %55, %cst_22 [2] : vector<2x8x8xf32> to vector<2x8xf32>
    %57 = vector.shape_cast %56 : vector<2x8xf32> to vector<2x8x1xf32>
    %58 = vector.broadcast %57 : vector<2x8x1xf32> to vector<2x8x8xf32>
    %59 = arith.subf %55, %58 : vector<2x8x8xf32>
    %60 = math.exp %59 : vector<2x8x8xf32>
    %cst_23 = arith.constant dense<0.000000e+00> : vector<2x8xf32>
    %61 = vector.multi_reduction <add>, %60, %cst_23 [2] : vector<2x8x8xf32> to vector<2x8xf32>
    %62 = vector.shape_cast %61 : vector<2x8xf32> to vector<2x8x1xf32>
    %63 = tpu.reciprocal %62 {approx = true} : vector<2x8x1xf32> -> vector<2x8x1xf32>
    %64 = vector.broadcast %63 : vector<2x8x1xf32> to vector<2x8x8xf32>
    %65 = arith.mulf %60, %64 : vector<2x8x8xf32>
    %66 = arith.truncf %65 : vector<2x8x8xf32> to vector<2x8x8xbf16>
    "tpu.trace_start"() <{level = 10 : i32, message = "bqk,bkd->bqd"}> : () -> ()
    %cst_24 = arith.constant dense<0.000000e+00> : vector<2x8x8xf32>
    %67 = tpu.matmul %66, %50, %cst_24 {dimension_numbers = #tpu.dot_dimension_numbers<[2], [1], [1], [2], [0, 0, 0, 1, 1, 2], [0], [0]>} : vector<2x8x8xbf16>, vector<2x8x8xbf16>, vector<2x8x8xf32> -> vector<2x8x8xf32>
    "tpu.trace_stop"() : () -> ()
    %68 = vector.shape_cast %67 : vector<2x8x8xf32> to vector<16x8xf32>
    %c0_25 = arith.constant 0 : index
    %c0_26 = arith.constant 0 : index
    %69 = vector.load %arg16[%c0_25, %c0_26] : memref<16x32xf32, #tpu.memory_space<vmem>>, vector<16x8xf32>
    tpu.vector_store %arg16[%c0_25, %c0_26], %68 {strides = array<i32>} : memref<16x32xf32, #tpu.memory_space<vmem>>, vector<16x8xf32>,
    %70 = vector.extract_strided_slice %40 {offsets = [0, 0, 8], sizes = [2, 8, 8], strides = [1, 1, 1]} : vector<2x8x32xf32> to vector<2x8x8xf32>
    %71 = arith.truncf %70 : vector<2x8x8xf32> to vector<2x8x8xbf16>
    %72 = vector.extract_strided_slice %42 {offsets = [0, 0, 8], sizes = [2, 8, 8], strides = [1, 1, 1]} : vector<2x8x32xf32> to vector<2x8x8xf32>
    %73 = arith.truncf %72 : vector<2x8x8xf32> to vector<2x8x8xbf16>
    %74 = vector.extract_strided_slice %44 {offsets = [0, 0, 8], sizes = [2, 8, 8], strides = [1, 1, 1]} : vector<2x8x32xf32> to vector<2x8x8xf32>
    %75 = arith.truncf %74 : vector<2x8x8xf32> to vector<2x8x8xbf16>
    "tpu.trace_start"() <{level = 10 : i32, message = "bqd,bkd->bqk"}> : () -> ()
    %cst_27 = arith.constant dense<0.000000e+00> : vector<2x8x8xf32>
    %76 = tpu.matmul %71, %73, %cst_27 {dimension_numbers = #tpu.dot_dimension_numbers<[2], [2], [1], [1], [0, 0, 0, 1, 1, 1], [0], [0]>} : vector<2x8x8xbf16>, vector<2x8x8xbf16>, vector<2x8x8xf32> -> vector<2x8x8xf32>
    "tpu.trace_stop"() : () -> ()
    %cst_28 = arith.constant 0.353553385 : f32
    %77 = vector.broadcast %cst_28 : f32 to vector<2x8x8xf32>
    %78 = arith.mulf %76, %77 : vector<2x8x8xf32>
    %79 = vector.broadcast %7 : vector<2x1x8xf32> to vector<2x8x8xf32>
    %80 = arith.addf %78, %79 : vector<2x8x8xf32>
    %cst_29 = arith.constant dense<0xFF800000> : vector<2x8xf32>
    %81 = vector.multi_reduction <maximumf>, %80, %cst_29 [2] : vector<2x8x8xf32> to vector<2x8xf32>
    %82 = vector.shape_cast %81 : vector<2x8xf32> to vector<2x8x1xf32>
    %83 = vector.broadcast %82 : vector<2x8x1xf32> to vector<2x8x8xf32>
    %84 = arith.subf %80, %83 : vector<2x8x8xf32>
    %85 = math.exp %84 : vector<2x8x8xf32>
    %cst_30 = arith.constant dense<0.000000e+00> : vector<2x8xf32>
    %86 = vector.multi_reduction <add>, %85, %cst_30 [2] : vector<2x8x8xf32> to vector<2x8xf32>
    %87 = vector.shape_cast %86 : vector<2x8xf32> to vector<2x8x1xf32>
    %88 = tpu.reciprocal %87 {approx = true} : vector<2x8x1xf32> -> vector<2x8x1xf32>
    %89 = vector.broadcast %88 : vector<2x8x1xf32> to vector<2x8x8xf32>
    %90 = arith.mulf %85, %89 : vector<2x8x8xf32>
    %91 = arith.truncf %90 : vector<2x8x8xf32> to vector<2x8x8xbf16>
    "tpu.trace_start"() <{level = 10 : i32, message = "bqk,bkd->bqd"}> : () -> ()
    %cst_31 = arith.constant dense<0.000000e+00> : vector<2x8x8xf32>
    %92 = tpu.matmul %91, %75, %cst_31 {dimension_numbers = #tpu.dot_dimension_numbers<[2], [1], [1], [2], [0, 0, 0, 1, 1, 2], [0], [0]>} : vector<2x8x8xbf16>, vector<2x8x8xbf16>, vector<2x8x8xf32> -> vector<2x8x8xf32>
    "tpu.trace_stop"() : () -> ()
    %93 = vector.shape_cast %92 : vector<2x8x8xf32> to vector<16x8xf32>
    %c0_32 = arith.constant 0 : index
    %c8 = arith.constant 8 : index
    %94 = vector.load %arg16[%c0_32, %c8] : memref<16x32xf32, #tpu.memory_space<vmem>>, vector<16x8xf32>
    tpu.vector_store %arg16[%c0_32, %c8], %93 {strides = array<i32>} : memref<16x32xf32, #tpu.memory_space<vmem>>, vector<16x8xf32>,
    %95 = vector.extract_strided_slice %40 {offsets = [0, 0, 16], sizes = [2, 8, 8], strides = [1, 1, 1]} : vector<2x8x32xf32> to vector<2x8x8xf32>
    %96 = arith.truncf %95 : vector<2x8x8xf32> to vector<2x8x8xbf16>
    %97 = vector.extract_strided_slice %42 {offsets = [0, 0, 16], sizes = [2, 8, 8], strides = [1, 1, 1]} : vector<2x8x32xf32> to vector<2x8x8xf32>
    %98 = arith.truncf %97 : vector<2x8x8xf32> to vector<2x8x8xbf16>
    %99 = vector.extract_strided_slice %44 {offsets = [0, 0, 16], sizes = [2, 8, 8], strides = [1, 1, 1]} : vector<2x8x32xf32> to vector<2x8x8xf32>
    %100 = arith.truncf %99 : vector<2x8x8xf32> to vector<2x8x8xbf16>
    "tpu.trace_start"() <{level = 10 : i32, message = "bqd,bkd->bqk"}> : () -> ()
    %cst_33 = arith.constant dense<0.000000e+00> : vector<2x8x8xf32>
    %101 = tpu.matmul %96, %98, %cst_33 {dimension_numbers = #tpu.dot_dimension_numbers<[2], [2], [1], [1], [0, 0, 0, 1, 1, 1], [0], [0]>} : vector<2x8x8xbf16>, vector<2x8x8xbf16>, vector<2x8x8xf32> -> vector<2x8x8xf32>
    "tpu.trace_stop"() : () -> ()
    %cst_34 = arith.constant 0.353553385 : f32
    %102 = vector.broadcast %cst_34 : f32 to vector<2x8x8xf32>
    %103 = arith.mulf %101, %102 : vector<2x8x8xf32>
    %104 = vector.broadcast %7 : vector<2x1x8xf32> to vector<2x8x8xf32>
    %105 = arith.addf %103, %104 : vector<2x8x8xf32>
    %cst_35 = arith.constant dense<0xFF800000> : vector<2x8xf32>
    %106 = vector.multi_reduction <maximumf>, %105, %cst_35 [2] : vector<2x8x8xf32> to vector<2x8xf32>
    %107 = vector.shape_cast %106 : vector<2x8xf32> to vector<2x8x1xf32>
    %108 = vector.broadcast %107 : vector<2x8x1xf32> to vector<2x8x8xf32>
    %109 = arith.subf %105, %108 : vector<2x8x8xf32>
    %110 = math.exp %109 : vector<2x8x8xf32>
    %cst_36 = arith.constant dense<0.000000e+00> : vector<2x8xf32>
    %111 = vector.multi_reduction <add>, %110, %cst_36 [2] : vector<2x8x8xf32> to vector<2x8xf32>
    %112 = vector.shape_cast %111 : vector<2x8xf32> to vector<2x8x1xf32>
    %113 = tpu.reciprocal %112 {approx = true} : vector<2x8x1xf32> -> vector<2x8x1xf32>
    %114 = vector.broadcast %113 : vector<2x8x1xf32> to vector<2x8x8xf32>
    %115 = arith.mulf %110, %114 : vector<2x8x8xf32>
    %116 = arith.truncf %115 : vector<2x8x8xf32> to vector<2x8x8xbf16>
    "tpu.trace_start"() <{level = 10 : i32, message = "bqk,bkd->bqd"}> : () -> ()
    %cst_37 = arith.constant dense<0.000000e+00> : vector<2x8x8xf32>
    %117 = tpu.matmul %116, %100, %cst_37 {dimension_numbers = #tpu.dot_dimension_numbers<[2], [1], [1], [2], [0, 0, 0, 1, 1, 2], [0], [0]>} : vector<2x8x8xbf16>, vector<2x8x8xbf16>, vector<2x8x8xf32> -> vector<2x8x8xf32>
    "tpu.trace_stop"() : () -> ()
    %118 = vector.shape_cast %117 : vector<2x8x8xf32> to vector<16x8xf32>
    %c0_38 = arith.constant 0 : index
    %c16 = arith.constant 16 : index
    %119 = vector.load %arg16[%c0_38, %c16] : memref<16x32xf32, #tpu.memory_space<vmem>>, vector<16x8xf32>
    tpu.vector_store %arg16[%c0_38, %c16], %118 {strides = array<i32>} : memref<16x32xf32, #tpu.memory_space<vmem>>, vector<16x8xf32>,
    %120 = vector.extract_strided_slice %40 {offsets = [0, 0, 24], sizes = [2, 8, 8], strides = [1, 1, 1]} : vector<2x8x32xf32> to vector<2x8x8xf32>
    %121 = arith.truncf %120 : vector<2x8x8xf32> to vector<2x8x8xbf16>
    %122 = vector.extract_strided_slice %42 {offsets = [0, 0, 24], sizes = [2, 8, 8], strides = [1, 1, 1]} : vector<2x8x32xf32> to vector<2x8x8xf32>
    %123 = arith.truncf %122 : vector<2x8x8xf32> to vector<2x8x8xbf16>
    %124 = vector.extract_strided_slice %44 {offsets = [0, 0, 24], sizes = [2, 8, 8], strides = [1, 1, 1]} : vector<2x8x32xf32> to vector<2x8x8xf32>
    %125 = arith.truncf %124 : vector<2x8x8xf32> to vector<2x8x8xbf16>
    "tpu.trace_start"() <{level = 10 : i32, message = "bqd,bkd->bqk"}> : () -> ()
    %cst_39 = arith.constant dense<0.000000e+00> : vector<2x8x8xf32>
    %126 = tpu.matmul %121, %123, %cst_39 {dimension_numbers = #tpu.dot_dimension_numbers<[2], [2], [1], [1], [0, 0, 0, 1, 1, 1], [0], [0]>} : vector<2x8x8xbf16>, vector<2x8x8xbf16>, vector<2x8x8xf32> -> vector<2x8x8xf32>
    "tpu.trace_stop"() : () -> ()
    %cst_40 = arith.constant 0.353553385 : f32
    %127 = vector.broadcast %cst_40 : f32 to vector<2x8x8xf32>
    %128 = arith.mulf %126, %127 : vector<2x8x8xf32>
    %129 = vector.broadcast %7 : vector<2x1x8xf32> to vector<2x8x8xf32>
    %130 = arith.addf %128, %129 : vector<2x8x8xf32>
    %cst_41 = arith.constant dense<0xFF800000> : vector<2x8xf32>
    %131 = vector.multi_reduction <maximumf>, %130, %cst_41 [2] : vector<2x8x8xf32> to vector<2x8xf32>
    %132 = vector.shape_cast %131 : vector<2x8xf32> to vector<2x8x1xf32>
    %133 = vector.broadcast %132 : vector<2x8x1xf32> to vector<2x8x8xf32>
    %134 = arith.subf %130, %133 : vector<2x8x8xf32>
    %135 = math.exp %134 : vector<2x8x8xf32>
    %cst_42 = arith.constant dense<0.000000e+00> : vector<2x8xf32>
    %136 = vector.multi_reduction <add>, %135, %cst_42 [2] : vector<2x8x8xf32> to vector<2x8xf32>
    %137 = vector.shape_cast %136 : vector<2x8xf32> to vector<2x8x1xf32>
    %138 = tpu.reciprocal %137 {approx = true} : vector<2x8x1xf32> -> vector<2x8x1xf32>
    %139 = vector.broadcast %138 : vector<2x8x1xf32> to vector<2x8x8xf32>
    %140 = arith.mulf %135, %139 : vector<2x8x8xf32>
    %141 = arith.truncf %140 : vector<2x8x8xf32> to vector<2x8x8xbf16>
    "tpu.trace_start"() <{level = 10 : i32, message = "bqk,bkd->bqd"}> : () -> ()
    %cst_43 = arith.constant dense<0.000000e+00> : vector<2x8x8xf32>
    %142 = tpu.matmul %141, %125, %cst_43 {dimension_numbers = #tpu.dot_dimension_numbers<[2], [1], [1], [2], [0, 0, 0, 1, 1, 2], [0], [0]>} : vector<2x8x8xbf16>, vector<2x8x8xbf16>, vector<2x8x8xf32> -> vector<2x8x8xf32>
    "tpu.trace_stop"() : () -> ()
    %143 = vector.shape_cast %142 : vector<2x8x8xf32> to vector<16x8xf32>
    %c0_44 = arith.constant 0 : index
    %c24 = arith.constant 24 : index
    %144 = vector.load %arg16[%c0_44, %c24] : memref<16x32xf32, #tpu.memory_space<vmem>>, vector<16x8xf32>
    tpu.vector_store %arg16[%c0_44, %c24], %143 {strides = array<i32>} : memref<16x32xf32, #tpu.memory_space<vmem>>, vector<16x8xf32>,
    %c0_45 = arith.constant 0 : index
    %c0_46 = arith.constant 0 : index
    %145 = vector.load %arg16[%c0_45, %c0_46] : memref<16x32xf32, #tpu.memory_space<vmem>>, vector<16x32xf32>
    %146 = arith.truncf %145 : vector<16x32xf32> to vector<16x32xbf16>
    %c0_47 = arith.constant 0 : index
    %c0_48 = arith.constant 0 : index
    %147 = vector.load %arg5[%c0_47, %c0_48] : memref<32x32xbf16, #tpu.memory_space<vmem>>, vector<32x32xbf16>
    %cst_49 = arith.constant dense<0.000000e+00> : vector<16x32xf32>
    %148 = tpu.matmul %146, %147, %cst_49 {dimension_numbers = #tpu.dot_dimension_numbers<[1], [0], [0], [1], [0, 0, 1, 1], [], []>} : vector<16x32xbf16>, vector<32x32xbf16>, vector<16x32xf32> -> vector<16x32xf32>
    %c0_50 = arith.constant 0 : index
    %c0_51 = arith.constant 0 : index
    %149 = vector.load %arg6[%c0_50, %c0_51] : memref<1x32xf32, #tpu.memory_space<vmem>>, vector<1x32xf32>
    %150 = vector.broadcast %149 : vector<1x32xf32> to vector<16x32xf32>
    %151 = arith.addf %148, %150 : vector<16x32xf32>
    %152 = arith.addf %1, %151 : vector<16x32xf32>
    %c0_52 = arith.constant 0 : index
    %c0_53 = arith.constant 0 : index
    %153 = vector.load %arg13[%c0_52, %c0_53] : memref<1x32xf32, #tpu.memory_space<vmem>>, vector<1x32xf32>
    %c0_54 = arith.constant 0 : index
    %c0_55 = arith.constant 0 : index
    %154 = vector.load %arg14[%c0_54, %c0_55] : memref<1x32xf32, #tpu.memory_space<vmem>>, vector<1x32xf32>
    %cst_56 = arith.constant dense<0.000000e+00> : vector<16xf32>
    %155 = vector.multi_reduction <add>, %152, %cst_56 [1] : vector<16x32xf32> to vector<16xf32>
    %156 = vector.shape_cast %155 : vector<16xf32> to vector<16x1xf32>
    %cst_57 = arith.constant 3.200000e+01 : f32
    %157 = vector.broadcast %cst_57 : f32 to vector<16x1xf32>
    %158 = arith.divf %156, %157 : vector<16x1xf32>
    %159 = vector.broadcast %158 : vector<16x1xf32> to vector<16x32xf32>
    %160 = arith.subf %152, %159 : vector<16x32xf32>
    %161 = arith.mulf %160, %160 : vector<16x32xf32>
    %cst_58 = arith.constant dense<0.000000e+00> : vector<16xf32>
    %162 = vector.multi_reduction <add>, %161, %cst_58 [1] : vector<16x32xf32> to vector<16xf32>
    %163 = vector.shape_cast %162 : vector<16xf32> to vector<16x1xf32>
    %cst_59 = arith.constant 0.0322580636 : f32
    %164 = vector.broadcast %cst_59 : f32 to vector<16x1xf32>
    %165 = arith.mulf %163, %164 : vector<16x1xf32>
    %166 = math.sqrt %165 : vector<16x1xf32>
    %cst_60 = arith.constant 9.99999997E-7 : f32
    %167 = vector.broadcast %cst_60 : f32 to vector<16x1xf32>
    %168 = arith.addf %166, %167 : vector<16x1xf32>
    %169 = tpu.reciprocal %168 {approx = true} : vector<16x1xf32> -> vector<16x1xf32>
    %170 = vector.broadcast %158 : vector<16x1xf32> to vector<16x32xf32>
    %171 = arith.subf %152, %170 : vector<16x32xf32>
    %172 = vector.broadcast %153 : vector<1x32xf32> to vector<16x32xf32>
    %173 = arith.mulf %172, %171 : vector<16x32xf32>
    %174 = vector.broadcast %169 : vector<16x1xf32> to vector<16x32xf32>
    %175 = arith.mulf %173, %174 : vector<16x32xf32>
    %176 = vector.broadcast %154 : vector<1x32xf32> to vector<16x32xf32>
    %177 = arith.addf %175, %176 : vector<16x32xf32>
    %178 = arith.truncf %177 : vector<16x32xf32> to vector<16x32xbf16>
    %c0_61 = arith.constant 0 : index
    %c0_62 = arith.constant 0 : index
    %179 = vector.load %arg7[%c0_61, %c0_62] : memref<32x64xbf16, #tpu.memory_space<vmem>>, vector<32x64xbf16>
    %cst_63 = arith.constant dense<0.000000e+00> : vector<16x64xf32>
    %180 = tpu.matmul %178, %179, %cst_63 {dimension_numbers = #tpu.dot_dimension_numbers<[1], [0], [0], [1], [0, 0, 1, 1], [], []>} : vector<16x32xbf16>, vector<32x64xbf16>, vector<16x64xf32> -> vector<16x64xf32>
    %c0_64 = arith.constant 0 : index
    %c0_65 = arith.constant 0 : index
    %181 = vector.load %arg8[%c0_64, %c0_65] : memref<1x64xf32, #tpu.memory_space<vmem>>, vector<1x64xf32>
    %182 = vector.broadcast %181 : vector<1x64xf32> to vector<16x64xf32>
    %183 = arith.addf %180, %182 : vector<16x64xf32>
    %cst_66 = arith.constant 0.000000e+00 : f32
    %184 = vector.broadcast %cst_66 : f32 to vector<16x64xf32>
    %185 = arith.maximumf %183, %184 : vector<16x64xf32>
    %186 = arith.truncf %185 : vector<16x64xf32> to vector<16x64xbf16>
    %c0_67 = arith.constant 0 : index
    %c0_68 = arith.constant 0 : index
    %187 = vector.load %arg9[%c0_67, %c0_68] : memref<64x32xbf16, #tpu.memory_space<vmem>>, vector<64x32xbf16>
    %cst_69 = arith.constant dense<0.000000e+00> : vector<16x32xf32>
    %188 = tpu.matmul %186, %187, %cst_69 {dimension_numbers = #tpu.dot_dimension_numbers<[1], [0], [0], [1], [0, 0, 1, 1], [], []>} : vector<16x64xbf16>, vector<64x32xbf16>, vector<16x32xf32> -> vector<16x32xf32>
    %c0_70 = arith.constant 0 : index
    %c0_71 = arith.constant 0 : index
    %189 = vector.load %arg10[%c0_70, %c0_71] : memref<1x32xf32, #tpu.memory_space<vmem>>, vector<1x32xf32>
    %190 = vector.broadcast %189 : vector<1x32xf32> to vector<16x32xf32>
    %191 = arith.addf %188, %190 : vector<16x32xf32>
    %192 = arith.addf %152, %191 : vector<16x32xf32>
    %193 = vector.shape_cast %192 : vector<16x32xf32> to vector<2x8x32xf32>
    %c0_72 = arith.constant 0 : index
    %c0_73 = arith.constant 0 : index
    %c0_74 = arith.constant 0 : index
    %194 = vector.load %arg15[%c0_72, %c0_73, %c0_74] : memref<2x8x32xf32, #tpu.memory_space<vmem>>, vector<2x8x32xf32>
    tpu.vector_store %arg15[%c0_72, %c0_73, %c0_74], %193 {strides = array<i32>} : memref<2x8x32xf32, #tpu.memory_space<vmem>>, vector<2x8x32xf32>,
    return
  }
  func.func @transform_0(%arg0: i32) -> (i32, i32, i32) {
    %c0_i32 = arith.constant 0 : i32
    %c0_i32_0 = arith.constant 0 : i32
    %c0_i32_1 = arith.constant 0 : i32
    return %arg0, %c0_i32, %c0_i32_0 : i32, i32, i32
  }
  func.func @transform_1(%arg0: i32) -> (i32, i32, i32) {
    %c0_i32 = arith.constant 0 : i32
    %c0_i32_0 = arith.constant 0 : i32
    %c0_i32_1 = arith.constant 0 : i32
    return %arg0, %c0_i32, %c0_i32_0 : i32, i32, i32
  }
  func.func @transform_2(%arg0: i32) -> (i32, i32) {
    %c0_i32 = arith.constant 0 : i32
    %c0_i32_0 = arith.constant 0 : i32
    %c0_i32_1 = arith.constant 0 : i32
    return %c0_i32, %c0_i32_0 : i32, i32
  }
  func.func @transform_3(%arg0: i32) -> (i32, i32) {
    %c0_i32 = arith.constant 0 : i32
    %c0_i32_0 = arith.constant 0 : i32
    %c0_i32_1 = arith.constant 0 : i32
    return %c0_i32, %c0_i32_0 : i32, i32
  }
  func.func @transform_4(%arg0: i32) -> (i32, i32) {
    %c0_i32 = arith.constant 0 : i32
    %c0_i32_0 = arith.constant 0 : i32
    %c0_i32_1 = arith.constant 0 : i32
    return %c0_i32, %c0_i32_0 : i32, i32
  }
  func.func @transform_5(%arg0: i32) -> (i32, i32) {
    %c0_i32 = arith.constant 0 : i32
    %c0_i32_0 = arith.constant 0 : i32
    %c0_i32_1 = arith.constant 0 : i32
    return %c0_i32, %c0_i32_0 : i32, i32
  }
  func.func @transform_6(%arg0: i32) -> (i32, i32) {
    %c0_i32 = arith.constant 0 : i32
    %c0_i32_0 = arith.constant 0 : i32
    %c0_i32_1 = arith.constant 0 : i32
    return %c0_i32, %c0_i32_0 : i32, i32
  }
  func.func @transform_7(%arg0: i32) -> (i32, i32) {
    %c0_i32 = arith.constant 0 : i32
    %c0_i32_0 = arith.constant 0 : i32
    %c0_i32_1 = arith.constant 0 : i32
    return %c0_i32, %c0_i32_0 : i32, i32
  }
  func.func @transform_8(%arg0: i32) -> (i32, i32) {
    %c0_i32 = arith.constant 0 : i32
    %c0_i32_0 = arith.constant 0 : i32
    %c0_i32_1 = arith.constant 0 : i32
    return %c0_i32, %c0_i32_0 : i32, i32
  }
  func.func @transform_9(%arg0: i32) -> (i32, i32) {
    %c0_i32 = arith.constant 0 : i32
    %c0_i32_0 = arith.constant 0 : i32
    %c0_i32_1 = arith.constant 0 : i32
    return %c0_i32, %c0_i32_0 : i32, i32
  }
  func.func @transform_10(%arg0: i32) -> (i32, i32) {
    %c0_i32 = arith.constant 0 : i32
    %c0_i32_0 = arith.constant 0 : i32
    %c0_i32_1 = arith.constant 0 : i32
    return %c0_i32, %c0_i32_0 : i32, i32
  }
  func.func @transform_11(%arg0: i32) -> (i32, i32) {
    %c0_i32 = arith.constant 0 : i32
    %c0_i32_0 = arith.constant 0 : i32
    %c0_i32_1 = arith.constant 0 : i32
    return %c0_i32, %c0_i32_0 : i32, i32
  }
  func.func @transform_12(%arg0: i32) -> (i32, i32) {
    %c0_i32 = arith.constant 0 : i32
    %c0_i32_0 = arith.constant 0 : i32
    %c0_i32_1 = arith.constant 0 : i32
    return %c0_i32, %c0_i32_0 : i32, i32
  }
  func.func @transform_13(%arg0: i32) -> (i32, i32) {
    %c0_i32 = arith.constant 0 : i32
    %c0_i32_0 = arith.constant 0 : i32
    %c0_i32_1 = arith.constant 0 : i32
    return %c0_i32, %c0_i32_0 : i32, i32
  }
  func.func @transform_14(%arg0: i32) -> (i32, i32, i32) {
    %c0_i32 = arith.constant 0 : i32
    %c0_i32_0 = arith.constant 0 : i32
    %c0_i32_1 = arith.constant 0 : i32
    return %arg0, %c0_i32, %c0_i32_0 : i32, i32, i32
  }
}

</mosaic_0001>

<llo_original>
// kernel: tpu_custom_call.1
$region0: #{tpu_custom_call.1}
  #allocation0 [shape = 'u32[]', space=smem, size = 0x4, offset = 0x4, fixed_abs, tag = 'smem constant byte address 0x4 - core index']
  #allocation1 [shape = 'u32[144,128]{1,0:T(1,128)}', space=vmem, size = 0x12000, scoped, tag = 'internal scratch']
  #allocation2 [shape = 'f32[16,32]{1,0:T(8,128)}', space=vmem, size = 0x2000, scoped, tag = 'scratch operand']
  %s0 = inlined_call_operand.vmem [shape: f32[2,8,32], index: 0, kind: input, shape index: {}]
  %s1 = inlined_call_operand.vmem [shape: s32[2,1,8], index: 1, kind: input, shape index: {}]
  %s2 = inlined_call_operand.vmem [shape: bf16[32,96], index: 2, kind: input, shape index: {}]
  %s3 = inlined_call_operand.vmem [shape: f32[1,96], index: 3, kind: input, shape index: {}]
  %s4 = inlined_call_operand.vmem [shape: bf16[32,32], index: 4, kind: input, shape index: {}]
  %s5 = inlined_call_operand.vmem [shape: f32[1,32], index: 5, kind: input, shape index: {}]
  %s6 = inlined_call_operand.hbm [shape: bf16[32,64], index: 6, kind: input, shape index: {}]
  %s7 = inlined_call_operand.vmem [shape: f32[1,64], index: 7, kind: input, shape index: {}]
  %s8 = inlined_call_operand.vmem [shape: bf16[64,32], index: 8, kind: input, shape index: {}]
  %s9 = inlined_call_operand.vmem [shape: f32[1,32], index: 9, kind: input, shape index: {}]
  %s10 = inlined_call_operand.vmem [shape: f32[1,32], index: 10, kind: input, shape index: {}]
  %s11 = inlined_call_operand.vmem [shape: f32[1,32], index: 11, kind: input, shape index: {}]
  %s12 = inlined_call_operand.vmem [shape: f32[1,32], index: 12, kind: input, shape index: {}]
  %s13 = inlined_call_operand.vmem [shape: f32[1,32], index: 13, kind: input, shape index: {}]
  %s14 = inlined_call_operand.hbm [shape: f32[2,8,32], index: 14, kind: output, shape index: {}]
  %s15 = sld [smem:[#allocation0]]
  $region70: #{tpu_custom_call.1} parent=0
    _
  %s17 = ssub.s32 1, %s15
  %s18 = scalar_select 0, %s17, %s15
  $region1: #{tpu_custom_call.1} parent=0
    #allocation3 [shape = 'u8[8192]{0}', space=vmem, size = 0x2000, scoped, tag = 'input window, operand 6, single buffered']
    #allocation4 [shape = 's32[1]{0}', space=sflag, size = 0x4, scoped, tag = 'scoped memory for tpu_custom_call.1']
    #allocation5 [shape = 's32[1]{0}', space=sflag, size = 0x4, scoped, tag = 'scoped memory for tpu_custom_call.1']
    #allocation6 [shape = 'u8[8192]{0}', space=vmem, size = 0x2000, scoped, tag = 'output window, operand 0, single buffered']
    %19 = vsyncpa [#allocation4], 0
    %20 = vsyncpa [#allocation5], 0
    // Predicated region
    $region2: #{tpu_custom_call.1} parent=1 // pred_check
      _
    $region3: #{tpu_custom_call.1} parent=1 // pred_check_branch
      %22 = sbr.rel (0) target = $region5
    $region4: #{tpu_custom_call.1} parent=1 // pred_region
      _
    $region5: #{tpu_custom_call.1} parent=1 // pred_fallthru
      _
    // Predicated region
    $region6: #{tpu_custom_call.1} parent=1 // pred_check
      _
    $region7: #{tpu_custom_call.1} parent=1 // pred_check_branch
      %24 = sbr.rel (0) target = $region9
    $region8: #{tpu_custom_call.1} parent=1 // pred_region
      _
    $region9: #{tpu_custom_call.1} parent=1 // pred_fallthru
      _
    // Predicated region
    $region10: #{tpu_custom_call.1} parent=1 // pred_check
      _
    $region11: #{tpu_custom_call.1} parent=1 // pred_check_branch
      %26 = sbr.rel (0) target = $region13
    $region12: #{tpu_custom_call.1} parent=1 // pred_region
      _
    $region13: #{tpu_custom_call.1} parent=1 // pred_fallthru
      _
    // Predicated region
    $region14: #{tpu_custom_call.1} parent=1 // pred_check
      _
    $region15: #{tpu_custom_call.1} parent=1 // pred_check_branch
      %28 = sbr.rel (0) target = $region17
    $region16: #{tpu_custom_call.1} parent=1 // pred_region
      _
    $region17: #{tpu_custom_call.1} parent=1 // pred_fallthru
      _
    // Predicated region
    $region18: #{tpu_custom_call.1} parent=1 // pred_check
      _
    $region19: #{tpu_custom_call.1} parent=1 // pred_check_branch
      %30 = sbr.rel (0) target = $region21
    $region20: #{tpu_custom_call.1} parent=1 // pred_region
      _
    $region21: #{tpu_custom_call.1} parent=1 // pred_fallthru
      _
    // Predicated region
    $region22: #{tpu_custom_call.1} parent=1 // pred_check
      _
    $region23: #{tpu_custom_call.1} parent=1 // pred_check_branch
      %32 = sbr.rel (0) target = $region25
    $region24: #{tpu_custom_call.1} parent=1 // pred_region
      _
    $region25: #{tpu_custom_call.1} parent=1 // pred_fallthru
      _
    // Predicated region
    $region26: #{tpu_custom_call.1} parent=1 // pred_check
      _
    $region27: #{tpu_custom_call.1} parent=1 // pred_check_branch
      %34 = sbr.rel (0) target = $region29
    $region28: #{tpu_custom_call.1} parent=1 // pred_region
      %s36 = ssub.s32 256, 256
      %37 = vsyncadd [#allocation4], %s36
      %s38 = sshll.u32 [#allocation3], 4
      %s39 = int_to_ptr.vmem [resolvable:$true] %s38
      %44 = dma.hbm_to_vmem [thread:$0]  %s6, 256, %s39, [#allocation4], 64, 64, 4
    $region29: #{tpu_custom_call.1} parent=1 // pred_fallthru
      _
    // Predicated region
    $region30: #{tpu_custom_call.1} parent=1 // pred_check
      _
    $region31: #{tpu_custom_call.1} parent=1 // pred_check_branch
      %46 = sbr.rel (0) target = $region33
    $region32: #{tpu_custom_call.1} parent=1 // pred_region
      _
    $region33: #{tpu_custom_call.1} parent=1 // pred_fallthru
      _
    // Predicated region
    $region34: #{tpu_custom_call.1} parent=1 // pred_check
      _
    $region35: #{tpu_custom_call.1} parent=1 // pred_check_branch
      %48 = sbr.rel (0) target = $region37
    $region36: #{tpu_custom_call.1} parent=1 // pred_region
      _
    $region37: #{tpu_custom_call.1} parent=1 // pred_fallthru
      _
    // Predicated region
    $region38: #{tpu_custom_call.1} parent=1 // pred_check
      _
    $region39: #{tpu_custom_call.1} parent=1 // pred_check_branch
      %50 = sbr.rel (0) target = $region41
    $region40: #{tpu_custom_call.1} parent=1 // pred_region
      _
    $region41: #{tpu_custom_call.1} parent=1 // pred_fallthru
      _
    // Predicated region
    $region42: #{tpu_custom_call.1} parent=1 // pred_check
      _
    $region43: #{tpu_custom_call.1} parent=1 // pred_check_branch
      %52 = sbr.rel (0) target = $region45
    $region44: #{tpu_custom_call.1} parent=1 // pred_region
      _
    $region45: #{tpu_custom_call.1} parent=1 // pred_fallthru
      _
    // Predicated region
    $region46: #{tpu_custom_call.1} parent=1 // pred_check
      _
    $region47: #{tpu_custom_call.1} parent=1 // pred_check_branch
      %54 = sbr.rel (0) target = $region49
    $region48: #{tpu_custom_call.1} parent=1 // pred_region
      _
    $region49: #{tpu_custom_call.1} parent=1 // pred_fallthru
      _
    // Predicated region
    $region50: #{tpu_custom_call.1} parent=1 // pred_check
      _
    $region51: #{tpu_custom_call.1} parent=1 // pred_check_branch
      %56 = sbr.rel (0) target = $region53
    $region52: #{tpu_custom_call.1} parent=1 // pred_region
      _
    $region53: #{tpu_custom_call.1} parent=1 // pred_fallthru
      _
    // Predicated region
    $region54: #{tpu_custom_call.1} parent=1 // pred_check
      _
    $region55: #{tpu_custom_call.1} parent=1 // pred_check_branch
      %58 = sbr.rel (0) target = $region57
    $region56: #{tpu_custom_call.1} parent=1 // pred_region
      _
    $region57: #{tpu_custom_call.1} parent=1 // pred_fallthru
      _
    // Predicated region
    $region58: #{tpu_custom_call.1} parent=1 // pred_check
      _
    $region59: #{tpu_custom_call.1} parent=1 // pred_check_branch
      %60 = sbr.rel (0) target = $region61
    $region60: #{tpu_custom_call.1} parent=1 // pred_region
      %61 = dma.done [#allocation4], 256
    $region61: #{tpu_custom_call.1} parent=1 // pred_fallthru
      _
    %v63 = vld [vmem:[%s0] sm:$0xff]
    %v64 = vld [vmem:[%s0 + $0x8] sm:$0xff]
    %v65 = vld [vmem:[%s1] sm:$0x1]
    %v66 = vld [vmem:[%s1 + $0x1] sm:$0x1]
    %vm67 = vcmp.eq.s32.totalorder %v65, 0
    %vm68 = vcmp.eq.s32.totalorder %v66, 0
    %v69 = vsel %vm67, -1e+09, 0.0
    %v70 = vsel %vm68, -1e+09, 0.0
    %v71 = vld [vmem:[%s10] sm:$0x1]
    %v72 = vld [vmem:[%s11] sm:$0x1]
    %vm73 = vcmask 261120
    %v74 = vsel %vm73, %v63, 0.0
    %75 = vadd.xlane.f32.xlu0 %v74
    %v76 = vpop.xlane.xlu0 %75
    %v77 = vsel %vm73, %v64, 0.0
    %78 = vadd.xlane.f32.xlu0 %v77
    %v79 = vpop.xlane.xlu0 %78
    %v80 = vrcp.pop 32.0
    %v81 = vmul.f32 %v76, %v80
    %v82 = vmul.f32 %v79, %v80
    %v83 = vsub.f32 %v63, %v81
    %v84 = vsub.f32 %v64, %v82
    %v85 = vmul.f32 %v83, %v83
    %v86 = vmul.f32 %v84, %v84
    %v87 = vsel %vm73, %v85, 0.0
    %88 = vadd.xlane.f32.xlu0 %v87
    %v89 = vpop.xlane.xlu0 %88
    %v90 = vsel %vm73, %v86, 0.0
    %91 = vadd.xlane.f32.xlu0 %v90
    %v92 = vpop.xlane.xlu0 %91
    %v93 = vmul.f32 %v89, 0.032258064
    %v94 = vmul.f32 %v92, 0.032258064
    %v95 = vrsqrt.pop %v93
    %v96 = vmul.f32 %v93, %v95
    %vm97 = vcmp.eq.f32.partialorder %v93, inf
    %v98 = vsel %vm97, %v93, %v96
    %vm99 = vcmp.eq.f32.partialorder %v93, 0.0
    %v100 = vand.u32 %v93, 2147483648
    %v101 = vsel %vm99, %v100, %v98
    %v102 = vrsqrt.pop %v94
    %v103 = vmul.f32 %v94, %v102
    %vm104 = vcmp.eq.f32.partialorder %v94, inf
    %v105 = vsel %vm104, %v94, %v103
    %vm106 = vcmp.eq.f32.partialorder %v94, 0.0
    %v107 = vand.u32 %v94, 2147483648
    %v108 = vsel %vm106, %v107, %v105
    %v109 = vadd.f32 %v101, 1e-06
    %v110 = vadd.f32 %v108, 1e-06
    %v111 = vrcp.pop %v109
    %v112 = vrcp.pop %v110
    %v114 = vlaneseq
    %v115 = vshrl.u32 %v114, 7
    %v116 = vsub.s32 0, %v115
    %v117 = vrot.slane %v71, %v116
    %v119 = vmul.f32 %v117, %v83
    %v120 = vmul.f32 %v117, %v84
    %v121 = vmul.f32 %v119, %v111
    %v122 = vmul.f32 %v120, %v112
    %v124 = vlaneseq
    %v125 = vshrl.u32 %v124, 7
    %v126 = vsub.s32 0, %v125
    %v127 = vrot.slane %v72, %v126
    %v129 = vadd.f32 %v121, %v127
    %v130 = vadd.f32 %v122, %v127
    %v131 = vpack.c.bf16 %v130, %v129
    %v132 = vld [vmem:[%s2] sm:$0xf]
    %v133 = vld [vmem:[%s2 + $0x4] sm:$0xf]
    %v134 = vld [vmem:[%s2 + $0x8] sm:$0xf]
    %v135 = vld [vmem:[%s2 + $0xc] sm:$0xf]
    %v136 = vld [vmem:[%s3] sm:$0x1]
    %v138 = vlaneseq
    %v139 = vshrl.u32 %v138, 7
    %v140 = vsub.s32 0, %v139
    %v141 = vrot.slane %v136, %v140
    %v147 = vunpack.c.l.b16 %v132
    %v148 = vunpack.c.l.b16 %v133
    %v149 = vunpack.c.l.b16 %v134
    %v150 = vunpack.c.l.b16 %v135
    %v151 = vpack.c.b16 %v148, %v147
    %v152 = vpack.c.b16 %v150, %v149
    %v156 = vsel %vm73, %v131, 0
    %158 = vmatprep.subr.bf16.mxu0 0
    %159 = vmatpush1.bf16.msra.mxu0 %v151
    %160 = vmatprep.subr.bf16.mxu0 0
    %161 = vmatpush1.bf16.msra.mxu0 %v152
    %162 = vmatprep.subr.bf16.mxu0 0
    %163 = vmatpush1.bf16.msra.mxu0 0
    %164 = vmatprep.subr.bf16.mxu0 0
    %165 = vmatpush1.bf16.msra.mxu0 0
    %166 = vmatprep.subr.bf16.mxu0 0
    %167 = vmatpush1.bf16.msra.mxu0 0
    %168 = vmatprep.subr.bf16.mxu0 0
    %169 = vmatpush1.bf16.msra.mxu0 0
    %170 = vmatprep.subr.bf16.mxu0 0
    %171 = vmatpush1.bf16.msra.mxu0 0
    %172 = vmatprep.subr.bf16.mxu0 0
    %173 = vmatpush1.bf16.msra.mxu0 0
    %174 = vmatprep.subr.bf16.mxu0 0
    %175 = vmatpush1.bf16.msra.mxu0 0
    %176 = vmatprep.subr.bf16.mxu0 0
    %177 = vmatpush1.bf16.msra.mxu0 0
    %178 = vmatprep.subr.bf16.mxu0 0
    %179 = vmatpush1.bf16.msra.mxu0 0
    %180 = vmatprep.subr.bf16.mxu0 0
    %181 = vmatpush1.bf16.msra.mxu0 0
    %182 = vmatprep.subr.bf16.mxu0 0
    %183 = vmatpush1.bf16.msra.mxu0 0
    %184 = vmatprep.subr.bf16.mxu0 0
    %185 = vmatpush1.bf16.msra.mxu0 0
    %186 = vmatprep.subr.bf16.mxu0 0
    %187 = vmatpush1.bf16.msra.mxu0 0
    %188 = vmatprep.subr.bf16.mxu0 0
    %189 = vmatpush1.bf16.msra.mxu0 0
    %190 = vmatprep.mubr.bf16.mxu0 0
    %191 = vmatmul.mubr.bf16.gmra.mrb[0].mxu0 %v156
    %v192 = vpop.f32.mrb[0].mxu0
    %v193 = vadd.f32 %v141, %v192
    %v194 = vpop.f32.mrb[0].mxu0
    %v195 = vpop.f32.mrb[0].mxu0
    %v196 = vadd.f32 %v141, %v195
    %v197 = vpop.f32.mrb[0].mxu0
    %198 = vdwg.mxu0
    %v199 = vpack.c.bf16 %v193, %v193
    %v200 = vpack.c.bf16 %v196, %v196
    %202 = vrot.lane.b32.xlu0 %v199, 96
    %v203 = vpop.permute.xlu0 %202
    %vm204 = vcmask 64512
    %v206 = vsel %vm204, %v199, 0
    %v209 = vsel %vm204, %v203, 0
    %211 = vmatprep.subr.bf16.mxu0 0
    %212 = vmatpush1.bf16.xpose.msra.mxu0 %v209
    %213 = vmatprep.subr.bf16.mxu0 0
    %214 = vmatpush1.bf16.xpose.msra.mxu0 0
    %215 = vmatprep.subr.bf16.mxu0 0
    %216 = vmatpush1.bf16.xpose.msra.mxu0 0
    %217 = vmatprep.subr.bf16.mxu0 0
    %218 = vmatpush1.bf16.xpose.msra.mxu0 0
    %219 = vmatprep.subr.bf16.mxu0 0
    %220 = vmatpush1.bf16.xpose.msra.mxu0 0
    %221 = vmatprep.subr.bf16.mxu0 0
    %222 = vmatpush1.bf16.xpose.msra.mxu0 0
    %223 = vmatprep.subr.bf16.mxu0 0
    %224 = vmatpush1.bf16.xpose.msra.mxu0 0
    %225 = vmatprep.subr.bf16.mxu0 0
    %226 = vmatpush1.bf16.xpose.msra.mxu0 0
    %227 = vmatprep.subr.bf16.mxu0 0
    %228 = vmatpush1.bf16.xpose.msra.mxu0 0
    %229 = vmatprep.subr.bf16.mxu0 0
    %230 = vmatpush1.bf16.xpose.msra.mxu0 0
    %231 = vmatprep.subr.bf16.mxu0 0
    %232 = vmatpush1.bf16.xpose.msra.mxu0 0
    %233 = vmatprep.subr.bf16.mxu0 0
    %234 = vmatpush1.bf16.xpose.msra.mxu0 0
    %235 = vmatprep.subr.bf16.mxu0 0
    %236 = vmatpush1.bf16.xpose.msra.mxu0 0
    %237 = vmatprep.subr.bf16.mxu0 0
    %238 = vmatpush1.bf16.xpose.msra.mxu0 0
    %239 = vmatprep.subr.bf16.mxu0 0
    %240 = vmatpush1.bf16.xpose.msra.mxu0 0
    %241 = vmatprep.subr.bf16.mxu0 0
    %242 = vmatpush1.bf16.xpose.msra.mxu0 0
    %243 = vmatprep.mubr.bf16.mxu0 0
    %244 = vmatmul.mubr.bf16.gmra.mrb[0].mxu0 %v206
    %v245 = vpop.f32.mrb[0].mxu0
    %v246 = vadd.f32 0.0, %v245
    %v247 = vpop.f32.mrb[0].mxu0
    %v248 = vpop.f32.mrb[0].mxu0
    %v249 = vpop.f32.mrb[0].mxu0
    %250 = vdwg.mxu0
    %252 = vrot.lane.b32.xlu0 %v200, 96
    %v253 = vpop.permute.xlu0 %252
    %v255 = vsel %vm204, %v200, 0
    %v258 = vsel %vm204, %v253, 0
    %260 = vmatprep.subr.bf16.mxu0 0
    %261 = vmatpush1.bf16.xpose.msra.mxu0 %v258
    %262 = vmatprep.subr.bf16.mxu0 0
    %263 = vmatpush1.bf16.xpose.msra.mxu0 0
    %264 = vmatprep.subr.bf16.mxu0 0
    %265 = vmatpush1.bf16.xpose.msra.mxu0 0
    %266 = vmatprep.subr.bf16.mxu0 0
    %267 = vmatpush1.bf16.xpose.msra.mxu0 0
    %268 = vmatprep.subr.bf16.mxu0 0
    %269 = vmatpush1.bf16.xpose.msra.mxu0 0
    %270 = vmatprep.subr.bf16.mxu0 0
    %271 = vmatpush1.bf16.xpose.msra.mxu0 0
    %272 = vmatprep.subr.bf16.mxu0 0
    %273 = vmatpush1.bf16.xpose.msra.mxu0 0
    %274 = vmatprep.subr.bf16.mxu0 0
    %275 = vmatpush1.bf16.xpose.msra.mxu0 0
    %276 = vmatprep.subr.bf16.mxu0 0
    %277 = vmatpush1.bf16.xpose.msra.mxu0 0
    %278 = vmatprep.subr.bf16.mxu0 0
    %279 = vmatpush1.bf16.xpose.msra.mxu0 0
    %280 = vmatprep.subr.bf16.mxu0 0
    %281 = vmatpush1.bf16.xpose.msra.mxu0 0
    %282 = vmatprep.subr.bf16.mxu0 0
    %283 = vmatpush1.bf16.xpose.msra.mxu0 0
    %284 = vmatprep.subr.bf16.mxu0 0
    %285 = vmatpush1.bf16.xpose.msra.mxu0 0
    %286 = vmatprep.subr.bf16.mxu0 0
    %287 = vmatpush1.bf16.xpose.msra.mxu0 0
    %288 = vmatprep.subr.bf16.mxu0 0
    %289 = vmatpush1.bf16.xpose.msra.mxu0 0
    %290 = vmatprep.subr.bf16.mxu0 0
    %291 = vmatpush1.bf16.xpose.msra.mxu0 0
    %292 = vmatprep.mubr.bf16.mxu0 0
    %293 = vmatmul.mubr.bf16.gmra.mrb[0].mxu0 %v255
    %v294 = vpop.f32.mrb[0].mxu0
    %v295 = vadd.f32 0.0, %v294
    %v296 = vpop.f32.mrb[0].mxu0
    %v297 = vpop.f32.mrb[0].mxu0
    %v298 = vpop.f32.mrb[0].mxu0
    %299 = vdwg.mxu0
    %v300 = vmul.f32 %v246, 0.35355338
    %v301 = vmul.f32 %v295, 0.35355338
    %v304 = vlaneseq
    %v305 = vshrl.u32 %v304, 7
    %v306 = vsub.s32 0, %v305
    %v307 = vrot.slane %v69, %v306
    %v308 = vlaneseq
    %v309 = vshrl.u32 %v308, 7
    %v310 = vsub.s32 0, %v309
    %v311 = vrot.slane %v70, %v310
    %v314 = vadd.f32 %v300, %v307
    %v315 = vadd.f32 %v301, %v311
    %v316 = vsel %vm204, %v314, -inf
    %317 = vmax.xlane.f32.xlu0 %v316
    %v318 = vpop.xlane.xlu0 %317
    %v319 = vsel %vm204, %v315, -inf
    %320 = vmax.xlane.f32.xlu0 %v319
    %v321 = vpop.xlane.xlu0 %320
    %v322 = vsub.f32 %v314, %v318
    %v323 = vsub.f32 %v315, %v321
    %v324 = vmul.f32 %v322, 1.442695
    %v325 = vpow.pop %v324
    %v326 = vmul.f32 %v323, 1.442695
    %v327 = vpow.pop %v326
    %v328 = vsel %vm204, %v325, 0.0
    %329 = vadd.xlane.f32.xlu0 %v328
    %v330 = vpop.xlane.xlu0 %329
    %v331 = vsel %vm204, %v327, 0.0
    %332 = vadd.xlane.f32.xlu0 %v331
    %v333 = vpop.xlane.xlu0 %332
    %v334 = vrcp.pop %v330
    %v335 = vrcp.pop %v333
    %v336 = vmul.f32 %v325, %v334
    %v337 = vmul.f32 %v327, %v335
    %v338 = vpack.c.bf16 %v336, %v336
    %v339 = vpack.c.bf16 %v337, %v337
    %340 = vrot.lane.b32.xlu0 %v199, 64
    %v341 = vpop.permute.xlu0 %340
    %v343 = vsel %vm204, %v338, 0
    %vm345 = vcmask 1043456
    %v347 = vsel %vm345, %v341, 0
    %349 = vmatprep.subr.bf16.mxu0 0
    %350 = vmatpush1.bf16.msra.mxu0 %v347
    %351 = vmatprep.subr.bf16.mxu0 0
    %352 = vmatpush1.bf16.msra.mxu0 0
    %353 = vmatprep.subr.bf16.mxu0 0
    %354 = vmatpush1.bf16.msra.mxu0 0
    %355 = vmatprep.subr.bf16.mxu0 0
    %356 = vmatpush1.bf16.msra.mxu0 0
    %357 = vmatprep.subr.bf16.mxu0 0
    %358 = vmatpush1.bf16.msra.mxu0 0
    %359 = vmatprep.subr.bf16.mxu0 0
    %360 = vmatpush1.bf16.msra.mxu0 0
    %361 = vmatprep.subr.bf16.mxu0 0
    %362 = vmatpush1.bf16.msra.mxu0 0
    %363 = vmatprep.subr.bf16.mxu0 0
    %364 = vmatpush1.bf16.msra.mxu0 0
    %365 = vmatprep.subr.bf16.mxu0 0
    %366 = vmatpush1.bf16.msra.mxu0 0
    %367 = vmatprep.subr.bf16.mxu0 0
    %368 = vmatpush1.bf16.msra.mxu0 0
    %369 = vmatprep.subr.bf16.mxu0 0
    %370 = vmatpush1.bf16.msra.mxu0 0
    %371 = vmatprep.subr.bf16.mxu0 0
    %372 = vmatpush1.bf16.msra.mxu0 0
    %373 = vmatprep.subr.bf16.mxu0 0
    %374 = vmatpush1.bf16.msra.mxu0 0
    %375 = vmatprep.subr.bf16.mxu0 0
    %376 = vmatpush1.bf16.msra.mxu0 0
    %377 = vmatprep.subr.bf16.mxu0 0
    %378 = vmatpush1.bf16.msra.mxu0 0
    %379 = vmatprep.subr.bf16.mxu0 0
    %380 = vmatpush1.bf16.msra.mxu0 0
    %381 = vmatprep.mubr.bf16.mxu0 0
    %382 = vmatmul.mubr.bf16.gmra.mrb[0].mxu0 %v343
    %v383 = vpop.f32.mrb[0].mxu0
    %v384 = vadd.f32 0.0, %v383
    %v385 = vpop.f32.mrb[0].mxu0
    %v386 = vpop.f32.mrb[0].mxu0
    %v387 = vpop.f32.mrb[0].mxu0
    %388 = vdwg.mxu0
    %389 = vrot.lane.b32.xlu0 %v200, 64
    %v390 = vpop.permute.xlu0 %389
    %v392 = vsel %vm204, %v339, 0
    %v395 = vsel %vm345, %v390, 0
    %397 = vmatprep.subr.bf16.mxu0 0
    %398 = vmatpush1.bf16.msra.mxu0 %v395
    %399 = vmatprep.subr.bf16.mxu0 0
    %400 = vmatpush1.bf16.msra.mxu0 0
    %401 = vmatprep.subr.bf16.mxu0 0
    %402 = vmatpush1.bf16.msra.mxu0 0
    %403 = vmatprep.subr.bf16.mxu0 0
    %404 = vmatpush1.bf16.msra.mxu0 0
    %405 = vmatprep.subr.bf16.mxu0 0
    %406 = vmatpush1.bf16.msra.mxu0 0
    %407 = vmatprep.subr.bf16.mxu0 0
    %408 = vmatpush1.bf16.msra.mxu0 0
    %409 = vmatprep.subr.bf16.mxu0 0
    %410 = vmatpush1.bf16.msra.mxu0 0
    %411 = vmatprep.subr.bf16.mxu0 0
    %412 = vmatpush1.bf16.msra.mxu0 0
    %413 = vmatprep.subr.bf16.mxu0 0
    %414 = vmatpush1.bf16.msra.mxu0 0
    %415 = vmatprep.subr.bf16.mxu0 0
    %416 = vmatpush1.bf16.msra.mxu0 0
    %417 = vmatprep.subr.bf16.mxu0 0
    %418 = vmatpush1.bf16.msra.mxu0 0
    %419 = vmatprep.subr.bf16.mxu0 0
    %420 = vmatpush1.bf16.msra.mxu0 0
    %421 = vmatprep.subr.bf16.mxu0 0
    %422 = vmatpush1.bf16.msra.mxu0 0
    %423 = vmatprep.subr.bf16.mxu0 0
    %424 = vmatpush1.bf16.msra.mxu0 0
    %425 = vmatprep.subr.bf16.mxu0 0
    %426 = vmatpush1.bf16.msra.mxu0 0
    %427 = vmatprep.subr.bf16.mxu0 0
    %428 = vmatpush1.bf16.msra.mxu0 0
    %429 = vmatprep.mubr.bf16.mxu0 0
    %430 = vmatmul.mubr.bf16.gmra.mrb[0].mxu0 %v392
    %v431 = vpop.f32.mrb[0].mxu0
    %v432 = vadd.f32 0.0, %v431
    %v433 = vpop.f32.mrb[0].mxu0
    %v434 = vpop.f32.mrb[0].mxu0
    %v435 = vpop.f32.mrb[0].mxu0
    %436 = vdwg.mxu0
    %437 = vst.msk [vmem:[#allocation2] sm:$0xff] %vm204, %v384
    %438 = vst.msk [vmem:[#allocation2 + $0x8] sm:$0xff] %vm204, %v432
    %439 = vrot.lane.b32.xlu0 %v199, 120
    %v440 = vpop.permute.xlu0 %439
    %441 = vrot.lane.b32.xlu0 %v199, 88
    %v442 = vpop.permute.xlu0 %441
    %v444 = vsel %vm204, %v440, 0
    %v447 = vsel %vm204, %v442, 0
    %449 = vmatprep.subr.bf16.mxu0 0
    %450 = vmatpush1.bf16.xpose.msra.mxu0 %v447
    %451 = vmatprep.subr.bf16.mxu0 0
    %452 = vmatpush1.bf16.xpose.msra.mxu0 0
    %453 = vmatprep.subr.bf16.mxu0 0
    %454 = vmatpush1.bf16.xpose.msra.mxu0 0
    %455 = vmatprep.subr.bf16.mxu0 0
    %456 = vmatpush1.bf16.xpose.msra.mxu0 0
    %457 = vmatprep.subr.bf16.mxu0 0
    %458 = vmatpush1.bf16.xpose.msra.mxu0 0
    %459 = vmatprep.subr.bf16.mxu0 0
    %460 = vmatpush1.bf16.xpose.msra.mxu0 0
    %461 = vmatprep.subr.bf16.mxu0 0
    %462 = vmatpush1.bf16.xpose.msra.mxu0 0
    %463 = vmatprep.subr.bf16.mxu0 0
    %464 = vmatpush1.bf16.xpose.msra.mxu0 0
    %465 = vmatprep.subr.bf16.mxu0 0
    %466 = vmatpush1.bf16.xpose.msra.mxu0 0
    %467 = vmatprep.subr.bf16.mxu0 0
    %468 = vmatpush1.bf16.xpose.msra.mxu0 0
    %469 = vmatprep.subr.bf16.mxu0 0
    %470 = vmatpush1.bf16.xpose.msra.mxu0 0
    %471 = vmatprep.subr.bf16.mxu0 0
    %472 = vmatpush1.bf16.xpose.msra.mxu0 0
    %473 = vmatprep.subr.bf16.mxu0 0
    %474 = vmatpush1.bf16.xpose.msra.mxu0 0
    %475 = vmatprep.subr.bf16.mxu0 0
    %476 = vmatpush1.bf16.xpose.msra.mxu0 0
    %477 = vmatprep.subr.bf16.mxu0 0
    %478 = vmatpush1.bf16.xpose.msra.mxu0 0
    %479 = vmatprep.subr.bf16.mxu0 0
    %480 = vmatpush1.bf16.xpose.msra.mxu0 0
    %481 = vmatprep.mubr.bf16.mxu0 0
    %482 = vmatmul.mubr.bf16.gmra.mrb[0].mxu0 %v444
    %v483 = vpop.f32.mrb[0].mxu0
    %v484 = vadd.f32 0.0, %v483
    %v485 = vpop.f32.mrb[0].mxu0
    %v486 = vpop.f32.mrb[0].mxu0
    %v487 = vpop.f32.mrb[0].mxu0
    %488 = vdwg.mxu0
    %489 = vrot.lane.b32.xlu0 %v200, 120
    %v490 = vpop.permute.xlu0 %489
    %491 = vrot.lane.b32.xlu0 %v200, 88
    %v492 = vpop.permute.xlu0 %491
    %v494 = vsel %vm204, %v490, 0
    %v497 = vsel %vm204, %v492, 0
    %499 = vmatprep.subr.bf16.mxu0 0
    %500 = vmatpush1.bf16.xpose.msra.mxu0 %v497
    %501 = vmatprep.subr.bf16.mxu0 0
    %502 = vmatpush1.bf16.xpose.msra.mxu0 0
    %503 = vmatprep.subr.bf16.mxu0 0
    %504 = vmatpush1.bf16.xpose.msra.mxu0 0
    %505 = vmatprep.subr.bf16.mxu0 0
    %506 = vmatpush1.bf16.xpose.msra.mxu0 0
    %507 = vmatprep.subr.bf16.mxu0 0
    %508 = vmatpush1.bf16.xpose.msra.mxu0 0
    %509 = vmatprep.subr.bf16.mxu0 0
    %510 = vmatpush1.bf16.xpose.msra.mxu0 0
    %511 = vmatprep.subr.bf16.mxu0 0
    %512 = vmatpush1.bf16.xpose.msra.mxu0 0
    %513 = vmatprep.subr.bf16.mxu0 0
    %514 = vmatpush1.bf16.xpose.msra.mxu0 0
    %515 = vmatprep.subr.bf16.mxu0 0
    %516 = vmatpush1.bf16.xpose.msra.mxu0 0
    %517 = vmatprep.subr.bf16.mxu0 0
    %518 = vmatpush1.bf16.xpose.msra.mxu0 0
    %519 = vmatprep.subr.bf16.mxu0 0
    %520 = vmatpush1.bf16.xpose.msra.mxu0 0
    %521 = vmatprep.subr.bf16.mxu0 0
    %522 = vmatpush1.bf16.xpose.msra.mxu0 0
    %523 = vmatprep.subr.bf16.mxu0 0
    %524 = vmatpush1.bf16.xpose.msra.mxu0 0
    %525 = vmatprep.subr.bf16.mxu0 0
    %526 = vmatpush1.bf16.xpose.msra.mxu0 0
    %527 = vmatprep.subr.bf16.mxu0 0
    %528 = vmatpush1.bf16.xpose.msra.mxu0 0
    %529 = vmatprep.subr.bf16.mxu0 0
    %530 = vmatpush1.bf16.xpose.msra.mxu0 0
    %531 = vmatprep.mubr.bf16.mxu0 0
    %532 = vmatmul.mubr.bf16.gmra.mrb[0].mxu0 %v494
    %v533 = vpop.f32.mrb[0].mxu0
    %v534 = vadd.f32 0.0, %v533
    %v535 = vpop.f32.mrb[0].mxu0
    %v536 = vpop.f32.mrb[0].mxu0
    %v537 = vpop.f32.mrb[0].mxu0
    %538 = vdwg.mxu0
    %v539 = vmul.f32 %v484, 0.35355338
    %v540 = vmul.f32 %v534, 0.35355338
    %v541 = vadd.f32 %v539, %v307
    %v542 = vadd.f32 %v540, %v311
    %v543 = vsel %vm204, %v541, -inf
    %544 = vmax.xlane.f32.xlu0 %v543
    %v545 = vpop.xlane.xlu0 %544
    %v546 = vsel %vm204, %v542, -inf
    %547 = vmax.xlane.f32.xlu0 %v546
    %v548 = vpop.xlane.xlu0 %547
    %v549 = vsub.f32 %v541, %v545
    %v550 = vsub.f32 %v542, %v548
    %v551 = vmul.f32 %v549, 1.442695
    %v552 = vpow.pop %v551
    %v553 = vmul.f32 %v550, 1.442695
    %v554 = vpow.pop %v553
    %v555 = vsel %vm204, %v552, 0.0
    %556 = vadd.xlane.f32.xlu0 %v555
    %v557 = vpop.xlane.xlu0 %556
    %v558 = vsel %vm204, %v554, 0.0
    %559 = vadd.xlane.f32.xlu0 %v558
    %v560 = vpop.xlane.xlu0 %559
    %v561 = vrcp.pop %v557
    %v562 = vrcp.pop %v560
    %v563 = vmul.f32 %v552, %v561
    %v564 = vmul.f32 %v554, %v562
    %v565 = vpack.c.bf16 %v563, %v563
    %v566 = vpack.c.bf16 %v564, %v564
    %567 = vrot.lane.b32.xlu0 %v199, 56
    %v568 = vpop.permute.xlu0 %567
    %v570 = vsel %vm204, %v565, 0
    %v573 = vsel %vm345, %v568, 0
    %575 = vmatprep.subr.bf16.mxu0 0
    %576 = vmatpush1.bf16.msra.mxu0 %v573
    %577 = vmatprep.subr.bf16.mxu0 0
    %578 = vmatpush1.bf16.msra.mxu0 0
    %579 = vmatprep.subr.bf16.mxu0 0
    %580 = vmatpush1.bf16.msra.mxu0 0
    %581 = vmatprep.subr.bf16.mxu0 0
    %582 = vmatpush1.bf16.msra.mxu0 0
    %583 = vmatprep.subr.bf16.mxu0 0
    %584 = vmatpush1.bf16.msra.mxu0 0
    %585 = vmatprep.subr.bf16.mxu0 0
    %586 = vmatpush1.bf16.msra.mxu0 0
    %587 = vmatprep.subr.bf16.mxu0 0
    %588 = vmatpush1.bf16.msra.mxu0 0
    %589 = vmatprep.subr.bf16.mxu0 0
    %590 = vmatpush1.bf16.msra.mxu0 0
    %591 = vmatprep.subr.bf16.mxu0 0
    %592 = vmatpush1.bf16.msra.mxu0 0
    %593 = vmatprep.subr.bf16.mxu0 0
    %594 = vmatpush1.bf16.msra.mxu0 0
    %595 = vmatprep.subr.bf16.mxu0 0
    %596 = vmatpush1.bf16.msra.mxu0 0
    %597 = vmatprep.subr.bf16.mxu0 0
    %598 = vmatpush1.bf16.msra.mxu0 0
    %599 = vmatprep.subr.bf16.mxu0 0
    %600 = vmatpush1.bf16.msra.mxu0 0
    %601 = vmatprep.subr.bf16.mxu0 0
    %602 = vmatpush1.bf16.msra.mxu0 0
    %603 = vmatprep.subr.bf16.mxu0 0
    %604 = vmatpush1.bf16.msra.mxu0 0
    %605 = vmatprep.subr.bf16.mxu0 0
    %606 = vmatpush1.bf16.msra.mxu0 0
    %607 = vmatprep.mubr.bf16.mxu0 0
    %608 = vmatmul.mubr.bf16.gmra.mrb[0].mxu0 %v570
    %v609 = vpop.f32.mrb[0].mxu0
    %v610 = vadd.f32 0.0, %v609
    %v611 = vpop.f32.mrb[0].mxu0
    %v612 = vpop.f32.mrb[0].mxu0
    %v613 = vpop.f32.mrb[0].mxu0
    %614 = vdwg.mxu0
    %615 = vrot.lane.b32.xlu0 %v200, 56
    %v616 = vpop.permute.xlu0 %615
    %v618 = vsel %vm204, %v566, 0
    %v621 = vsel %vm345, %v616, 0
    %623 = vmatprep.subr.bf16.mxu0 0
    %624 = vmatpush1.bf16.msra.mxu0 %v621
    %625 = vmatprep.subr.bf16.mxu0 0
    %626 = vmatpush1.bf16.msra.mxu0 0
    %627 = vmatprep.subr.bf16.mxu0 0
    %628 = vmatpush1.bf16.msra.mxu0 0
    %629 = vmatprep.subr.bf16.mxu0 0
    %630 = vmatpush1.bf16.msra.mxu0 0
    %631 = vmatprep.subr.bf16.mxu0 0
    %632 = vmatpush1.bf16.msra.mxu0 0
    %633 = vmatprep.subr.bf16.mxu0 0
    %634 = vmatpush1.bf16.msra.mxu0 0
    %635 = vmatprep.subr.bf16.mxu0 0
    %636 = vmatpush1.bf16.msra.mxu0 0
    %637 = vmatprep.subr.bf16.mxu0 0
    %638 = vmatpush1.bf16.msra.mxu0 0
    %639 = vmatprep.subr.bf16.mxu0 0
    %640 = vmatpush1.bf16.msra.mxu0 0
    %641 = vmatprep.subr.bf16.mxu0 0
    %642 = vmatpush1.bf16.msra.mxu0 0
    %643 = vmatprep.subr.bf16.mxu0 0
    %644 = vmatpush1.bf16.msra.mxu0 0
    %645 = vmatprep.subr.bf16.mxu0 0
    %646 = vmatpush1.bf16.msra.mxu0 0
    %647 = vmatprep.subr.bf16.mxu0 0
    %648 = vmatpush1.bf16.msra.mxu0 0
    %649 = vmatprep.subr.bf16.mxu0 0
    %650 = vmatpush1.bf16.msra.mxu0 0
    %651 = vmatprep.subr.bf16.mxu0 0
    %652 = vmatpush1.bf16.msra.mxu0 0
    %653 = vmatprep.subr.bf16.mxu0 0
    %654 = vmatpush1.bf16.msra.mxu0 0
    %655 = vmatprep.mubr.bf16.mxu0 0
    %656 = vmatmul.mubr.bf16.gmra.mrb[0].mxu0 %v618
    %v657 = vpop.f32.mrb[0].mxu0
    %v658 = vadd.f32 0.0, %v657
    %v659 = vpop.f32.mrb[0].mxu0
    %v660 = vpop.f32.mrb[0].mxu0
    %v661 = vpop.f32.mrb[0].mxu0
    %662 = vdwg.mxu0
    %665 = vrot.lane.b32.xlu0 %v610, 8
    %v666 = vpop.permute.xlu0 %665
    %667 = vrot.lane.b32.xlu0 %v658, 8
    %v668 = vpop.permute.xlu0 %667
    %vm671 = vcmask 130112
    %672 = vst.msk [vmem:[#allocation2] sm:$0xff] %vm671, %v666
    %673 = vst.msk [vmem:[#allocation2 + $0x8] sm:$0xff] %vm671, %v668
    %674 = vrot.lane.b32.xlu0 %v199, 112
    %v675 = vpop.permute.xlu0 %674
    %676 = vrot.lane.b32.xlu0 %v199, 80
    %v677 = vpop.permute.xlu0 %676
    %v679 = vsel %vm204, %v675, 0
    %v682 = vsel %vm204, %v677, 0
    %684 = vmatprep.subr.bf16.mxu0 0
    %685 = vmatpush1.bf16.xpose.msra.mxu0 %v682
    %686 = vmatprep.subr.bf16.mxu0 0
    %687 = vmatpush1.bf16.xpose.msra.mxu0 0
    %688 = vmatprep.subr.bf16.mxu0 0
    %689 = vmatpush1.bf16.xpose.msra.mxu0 0
    %690 = vmatprep.subr.bf16.mxu0 0
    %691 = vmatpush1.bf16.xpose.msra.mxu0 0
    %692 = vmatprep.subr.bf16.mxu0 0
    %693 = vmatpush1.bf16.xpose.msra.mxu0 0
    %694 = vmatprep.subr.bf16.mxu0 0
    %695 = vmatpush1.bf16.xpose.msra.mxu0 0
    %696 = vmatprep.subr.bf16.mxu0 0
    %697 = vmatpush1.bf16.xpose.msra.mxu0 0
    %698 = vmatprep.subr.bf16.mxu0 0
    %699 = vmatpush1.bf16.xpose.msra.mxu0 0
    %700 = vmatprep.subr.bf16.mxu0 0
    %701 = vmatpush1.bf16.xpose.msra.mxu0 0
    %702 = vmatprep.subr.bf16.mxu0 0
    %703 = vmatpush1.bf16.xpose.msra.mxu0 0
    %704 = vmatprep.subr.bf16.mxu0 0
    %705 = vmatpush1.bf16.xpose.msra.mxu0 0
    %706 = vmatprep.subr.bf16.mxu0 0
    %707 = vmatpush1.bf16.xpose.msra.mxu0 0
    %708 = vmatprep.subr.bf16.mxu0 0
    %709 = vmatpush1.bf16.xpose.msra.mxu0 0
    %710 = vmatprep.subr.bf16.mxu0 0
    %711 = vmatpush1.bf16.xpose.msra.mxu0 0
    %712 = vmatprep.subr.bf16.mxu0 0
    %713 = vmatpush1.bf16.xpose.msra.mxu0 0
    %714 = vmatprep.subr.bf16.mxu0 0
    %715 = vmatpush1.bf16.xpose.msra.mxu0 0
    %716 = vmatprep.mubr.bf16.mxu0 0
    %717 = vmatmul.mubr.bf16.gmra.mrb[0].mxu0 %v679
    %v718 = vpop.f32.mrb[0].mxu0
    %v719 = vadd.f32 0.0, %v718
    %v720 = vpop.f32.mrb[0].mxu0
    %v721 = vpop.f32.mrb[0].mxu0
    %v722 = vpop.f32.mrb[0].mxu0
    %723 = vdwg.mxu0
    %724 = vrot.lane.b32.xlu0 %v200, 112
    %v725 = vpop.permute.xlu0 %724
    %726 = vrot.lane.b32.xlu0 %v200, 80
    %v727 = vpop.permute.xlu0 %726
    %v729 = vsel %vm204, %v725, 0
    %v732 = vsel %vm204, %v727, 0
    %734 = vmatprep.subr.bf16.mxu0 0
    %735 = vmatpush1.bf16.xpose.msra.mxu0 %v732
    %736 = vmatprep.subr.bf16.mxu0 0
    %737 = vmatpush1.bf16.xpose.msra.mxu0 0
    %738 = vmatprep.subr.bf16.mxu0 0
    %739 = vmatpush1.bf16.xpose.msra.mxu0 0
    %740 = vmatprep.subr.bf16.mxu0 0
    %741 = vmatpush1.bf16.xpose.msra.mxu0 0
    %742 = vmatprep.subr.bf16.mxu0 0
    %743 = vmatpush1.bf16.xpose.msra.mxu0 0
    %744 = vmatprep.subr.bf16.mxu0 0
    %745 = vmatpush1.bf16.xpose.msra.mxu0 0
    %746 = vmatprep.subr.bf16.mxu0 0
    %747 = vmatpush1.bf16.xpose.msra.mxu0 0
    %748 = vmatprep.subr.bf16.mxu0 0
    %749 = vmatpush1.bf16.xpose.msra.mxu0 0
    %750 = vmatprep.subr.bf16.mxu0 0
    %751 = vmatpush1.bf16.xpose.msra.mxu0 0
    %752 = vmatprep.subr.bf16.mxu0 0
    %753 = vmatpush1.bf16.xpose.msra.mxu0 0
    %754 = vmatprep.subr.bf16.mxu0 0
    %755 = vmatpush1.bf16.xpose.msra.mxu0 0
    %756 = vmatprep.subr.bf16.mxu0 0
    %757 = vmatpush1.bf16.xpose.msra.mxu0 0
    %758 = vmatprep.subr.bf16.mxu0 0
    %759 = vmatpush1.bf16.xpose.msra.mxu0 0
    %760 = vmatprep.subr.bf16.mxu0 0
    %761 = vmatpush1.bf16.xpose.msra.mxu0 0
    %762 = vmatprep.subr.bf16.mxu0 0
    %763 = vmatpush1.bf16.xpose.msra.mxu0 0
    %764 = vmatprep.subr.bf16.mxu0 0
    %765 = vmatpush1.bf16.xpose.msra.mxu0 0
    %766 = vmatprep.mubr.bf16.mxu0 0
    %767 = vmatmul.mubr.bf16.gmra.mrb[0].mxu0 %v729
    %v768 = vpop.f32.mrb[0].mxu0
    %v769 = vadd.f32 0.0, %v768
    %v770 = vpop.f32.mrb[0].mxu0
    %v771 = vpop.f32.mrb[0].mxu0
    %v772 = vpop.f32.mrb[0].mxu0
    %773 = vdwg.mxu0
    %v774 = vmul.f32 %v719, 0.35355338
    %v775 = vmul.f32 %v769, 0.35355338
    %v776 = vadd.f32 %v774, %v307
    %v777 = vadd.f32 %v775, %v311
    %v778 = vsel %vm204, %v776, -inf
    %779 = vmax.xlane.f32.xlu0 %v778
    %v780 = vpop.xlane.xlu0 %779
    %v781 = vsel %vm204, %v777, -inf
    %782 = vmax.xlane.f32.xlu0 %v781
    %v783 = vpop.xlane.xlu0 %782
    %v784 = vsub.f32 %v776, %v780
    %v785 = vsub.f32 %v777, %v783
    %v786 = vmul.f32 %v784, 1.442695
    %v787 = vpow.pop %v786
    %v788 = vmul.f32 %v785, 1.442695
    %v789 = vpow.pop %v788
    %v790 = vsel %vm204, %v787, 0.0
    %791 = vadd.xlane.f32.xlu0 %v790
    %v792 = vpop.xlane.xlu0 %791
    %v793 = vsel %vm204, %v789, 0.0
    %794 = vadd.xlane.f32.xlu0 %v793
    %v795 = vpop.xlane.xlu0 %794
    %v796 = vrcp.pop %v792
    %v797 = vrcp.pop %v795
    %v798 = vmul.f32 %v787, %v796
    %v799 = vmul.f32 %v789, %v797
    %v800 = vpack.c.bf16 %v798, %v798
    %v801 = vpack.c.bf16 %v799, %v799
    %802 = vrot.lane.b32.xlu0 %v199, 48
    %v803 = vpop.permute.xlu0 %802
    %v805 = vsel %vm204, %v800, 0
    %v808 = vsel %vm345, %v803, 0
    %810 = vmatprep.subr.bf16.mxu0 0
    %811 = vmatpush1.bf16.msra.mxu0 %v808
    %812 = vmatprep.subr.bf16.mxu0 0
    %813 = vmatpush1.bf16.msra.mxu0 0
    %814 = vmatprep.subr.bf16.mxu0 0
    %815 = vmatpush1.bf16.msra.mxu0 0
    %816 = vmatprep.subr.bf16.mxu0 0
    %817 = vmatpush1.bf16.msra.mxu0 0
    %818 = vmatprep.subr.bf16.mxu0 0
    %819 = vmatpush1.bf16.msra.mxu0 0
    %820 = vmatprep.subr.bf16.mxu0 0
    %821 = vmatpush1.bf16.msra.mxu0 0
    %822 = vmatprep.subr.bf16.mxu0 0
    %823 = vmatpush1.bf16.msra.mxu0 0
    %824 = vmatprep.subr.bf16.mxu0 0
    %825 = vmatpush1.bf16.msra.mxu0 0
    %826 = vmatprep.subr.bf16.mxu0 0
    %827 = vmatpush1.bf16.msra.mxu0 0
    %828 = vmatprep.subr.bf16.mxu0 0
    %829 = vmatpush1.bf16.msra.mxu0 0
    %830 = vmatprep.subr.bf16.mxu0 0
    %831 = vmatpush1.bf16.msra.mxu0 0
    %832 = vmatprep.subr.bf16.mxu0 0
    %833 = vmatpush1.bf16.msra.mxu0 0
    %834 = vmatprep.subr.bf16.mxu0 0
    %835 = vmatpush1.bf16.msra.mxu0 0
    %836 = vmatprep.subr.bf16.mxu0 0
    %837 = vmatpush1.bf16.msra.mxu0 0
    %838 = vmatprep.subr.bf16.mxu0 0
    %839 = vmatpush1.bf16.msra.mxu0 0
    %840 = vmatprep.subr.bf16.mxu0 0
    %841 = vmatpush1.bf16.msra.mxu0 0
    %842 = vmatprep.mubr.bf16.mxu0 0
    %843 = vmatmul.mubr.bf16.gmra.mrb[0].mxu0 %v805
    %v844 = vpop.f32.mrb[0].mxu0
    %v845 = vadd.f32 0.0, %v844
    %v846 = vpop.f32.mrb[0].mxu0
    %v847 = vpop.f32.mrb[0].mxu0
    %v848 = vpop.f32.mrb[0].mxu0
    %849 = vdwg.mxu0
    %850 = vrot.lane.b32.xlu0 %v200, 48
    %v851 = vpop.permute.xlu0 %850
    %v853 = vsel %vm204, %v801, 0
    %v856 = vsel %vm345, %v851, 0
    %858 = vmatprep.subr.bf16.mxu0 0
    %859 = vmatpush1.bf16.msra.mxu0 %v856
    %860 = vmatprep.subr.bf16.mxu0 0
    %861 = vmatpush1.bf16.msra.mxu0 0
    %862 = vmatprep.subr.bf16.mxu0 0
    %863 = vmatpush1.bf16.msra.mxu0 0
    %864 = vmatprep.subr.bf16.mxu0 0
    %865 = vmatpush1.bf16.msra.mxu0 0
    %866 = vmatprep.subr.bf16.mxu0 0
    %867 = vmatpush1.bf16.msra.mxu0 0
    %868 = vmatprep.subr.bf16.mxu0 0
    %869 = vmatpush1.bf16.msra.mxu0 0
    %870 = vmatprep.subr.bf16.mxu0 0
    %871 = vmatpush1.bf16.msra.mxu0 0
    %872 = vmatprep.subr.bf16.mxu0 0
    %873 = vmatpush1.bf16.msra.mxu0 0
    %874 = vmatprep.subr.bf16.mxu0 0
    %875 = vmatpush1.bf16.msra.mxu0 0
    %876 = vmatprep.subr.bf16.mxu0 0
    %877 = vmatpush1.bf16.msra.mxu0 0
    %878 = vmatprep.subr.bf16.mxu0 0
    %879 = vmatpush1.bf16.msra.mxu0 0
    %880 = vmatprep.subr.bf16.mxu0 0
    %881 = vmatpush1.bf16.msra.mxu0 0
    %882 = vmatprep.subr.bf16.mxu0 0
    %883 = vmatpush1.bf16.msra.mxu0 0
    %884 = vmatprep.subr.bf16.mxu0 0
    %885 = vmatpush1.bf16.msra.mxu0 0
    %886 = vmatprep.subr.bf16.mxu0 0
    %887 = vmatpush1.bf16.msra.mxu0 0
    %888 = vmatprep.subr.bf16.mxu0 0
    %889 = vmatpush1.bf16.msra.mxu0 0
    %890 = vmatprep.mubr.bf16.mxu0 0
    %891 = vmatmul.mubr.bf16.gmra.mrb[0].mxu0 %v853
    %v892 = vpop.f32.mrb[0].mxu0
    %v893 = vadd.f32 0.0, %v892
    %v894 = vpop.f32.mrb[0].mxu0
    %v895 = vpop.f32.mrb[0].mxu0
    %v896 = vpop.f32.mrb[0].mxu0
    %897 = vdwg.mxu0
    %900 = vrot.lane.b32.xlu0 %v845, 16
    %v901 = vpop.permute.xlu0 %900
    %902 = vrot.lane.b32.xlu0 %v893, 16
    %v903 = vpop.permute.xlu0 %902
    %vm906 = vcmask 195712
    %907 = vst.msk [vmem:[#allocation2] sm:$0xff] %vm906, %v901
    %908 = vst.msk [vmem:[#allocation2 + $0x8] sm:$0xff] %vm906, %v903
    %909 = vrot.lane.b32.xlu0 %v199, 104
    %v910 = vpop.permute.xlu0 %909
    %911 = vrot.lane.b32.xlu0 %v199, 72
    %v912 = vpop.permute.xlu0 %911
    %v914 = vsel %vm204, %v910, 0
    %v917 = vsel %vm204, %v912, 0
    %919 = vmatprep.subr.bf16.mxu0 0
    %920 = vmatpush1.bf16.xpose.msra.mxu0 %v917
    %921 = vmatprep.subr.bf16.mxu0 0
    %922 = vmatpush1.bf16.xpose.msra.mxu0 0
    %923 = vmatprep.subr.bf16.mxu0 0
    %924 = vmatpush1.bf16.xpose.msra.mxu0 0
    %925 = vmatprep.subr.bf16.mxu0 0
    %926 = vmatpush1.bf16.xpose.msra.mxu0 0
    %927 = vmatprep.subr.bf16.mxu0 0
    %928 = vmatpush1.bf16.xpose.msra.mxu0 0
    %929 = vmatprep.subr.bf16.mxu0 0
    %930 = vmatpush1.bf16.xpose.msra.mxu0 0
    %931 = vmatprep.subr.bf16.mxu0 0
    %932 = vmatpush1.bf16.xpose.msra.mxu0 0
    %933 = vmatprep.subr.bf16.mxu0 0
    %934 = vmatpush1.bf16.xpose.msra.mxu0 0
    %935 = vmatprep.subr.bf16.mxu0 0
    %936 = vmatpush1.bf16.xpose.msra.mxu0 0
    %937 = vmatprep.subr.bf16.mxu0 0
    %938 = vmatpush1.bf16.xpose.msra.mxu0 0
    %939 = vmatprep.subr.bf16.mxu0 0
    %940 = vmatpush1.bf16.xpose.msra.mxu0 0
    %941 = vmatprep.subr.bf16.mxu0 0
    %942 = vmatpush1.bf16.xpose.msra.mxu0 0
    %943 = vmatprep.subr.bf16.mxu0 0
    %944 = vmatpush1.bf16.xpose.msra.mxu0 0
    %945 = vmatprep.subr.bf16.mxu0 0
    %946 = vmatpush1.bf16.xpose.msra.mxu0 0
    %947 = vmatprep.subr.bf16.mxu0 0
    %948 = vmatpush1.bf16.xpose.msra.mxu0 0
    %949 = vmatprep.subr.bf16.mxu0 0
    %950 = vmatpush1.bf16.xpose.msra.mxu0 0
    %951 = vmatprep.mubr.bf16.mxu0 0
    %952 = vmatmul.mubr.bf16.gmra.mrb[0].mxu0 %v914
    %v953 = vpop.f32.mrb[0].mxu0
    %v954 = vadd.f32 0.0, %v953
    %v955 = vpop.f32.mrb[0].mxu0
    %v956 = vpop.f32.mrb[0].mxu0
    %v957 = vpop.f32.mrb[0].mxu0
    %958 = vdwg.mxu0
    %959 = vrot.lane.b32.xlu0 %v200, 104
    %v960 = vpop.permute.xlu0 %959
    %961 = vrot.lane.b32.xlu0 %v200, 72
    %v962 = vpop.permute.xlu0 %961
    %v964 = vsel %vm204, %v960, 0
    %v967 = vsel %vm204, %v962, 0
    %969 = vmatprep.subr.bf16.mxu0 0
    %970 = vmatpush1.bf16.xpose.msra.mxu0 %v967
    %971 = vmatprep.subr.bf16.mxu0 0
    %972 = vmatpush1.bf16.xpose.msra.mxu0 0
    %973 = vmatprep.subr.bf16.mxu0 0
    %974 = vmatpush1.bf16.xpose.msra.mxu0 0
    %975 = vmatprep.subr.bf16.mxu0 0
    %976 = vmatpush1.bf16.xpose.msra.mxu0 0
    %977 = vmatprep.subr.bf16.mxu0 0
    %978 = vmatpush1.bf16.xpose.msra.mxu0 0
    %979 = vmatprep.subr.bf16.mxu0 0
    %980 = vmatpush1.bf16.xpose.msra.mxu0 0
    %981 = vmatprep.subr.bf16.mxu0 0
    %982 = vmatpush1.bf16.xpose.msra.mxu0 0
    %983 = vmatprep.subr.bf16.mxu0 0
    %984 = vmatpush1.bf16.xpose.msra.mxu0 0
    %985 = vmatprep.subr.bf16.mxu0 0
    %986 = vmatpush1.bf16.xpose.msra.mxu0 0
    %987 = vmatprep.subr.bf16.mxu0 0
    %988 = vmatpush1.bf16.xpose.msra.mxu0 0
    %989 = vmatprep.subr.bf16.mxu0 0
    %990 = vmatpush1.bf16.xpose.msra.mxu0 0
    %991 = vmatprep.subr.bf16.mxu0 0
    %992 = vmatpush1.bf16.xpose.msra.mxu0 0
    %993 = vmatprep.subr.bf16.mxu0 0
    %994 = vmatpush1.bf16.xpose.msra.mxu0 0
    %995 = vmatprep.subr.bf16.mxu0 0
    %996 = vmatpush1.bf16.xpose.msra.mxu0 0
    %997 = vmatprep.subr.bf16.mxu0 0
    %998 = vmatpush1.bf16.xpose.msra.mxu0 0
    %999 = vmatprep.subr.bf16.mxu0 0
    %1000 = vmatpush1.bf16.xpose.msra.mxu0 0
    %1001 = vmatprep.mubr.bf16.mxu0 0
    %1002 = vmatmul.mubr.bf16.gmra.mrb[0].mxu0 %v964
    %v1003 = vpop.f32.mrb[0].mxu0
    %v1004 = vadd.f32 0.0, %v1003
    %v1005 = vpop.f32.mrb[0].mxu0
    %v1006 = vpop.f32.mrb[0].mxu0
    %v1007 = vpop.f32.mrb[0].mxu0
    %1008 = vdwg.mxu0
    %v1009 = vmul.f32 %v954, 0.35355338
    %v1010 = vmul.f32 %v1004, 0.35355338
    %v1011 = vadd.f32 %v1009, %v307
    %v1012 = vadd.f32 %v1010, %v311
    %v1013 = vsel %vm204, %v1011, -inf
    %1014 = vmax.xlane.f32.xlu0 %v1013
    %v1015 = vpop.xlane.xlu0 %1014
    %v1016 = vsel %vm204, %v1012, -inf
    %1017 = vmax.xlane.f32.xlu0 %v1016
    %v1018 = vpop.xlane.xlu0 %1017
    %v1019 = vsub.f32 %v1011, %v1015
    %v1020 = vsub.f32 %v1012, %v1018
    %v1021 = vmul.f32 %v1019, 1.442695
    %v1022 = vpow.pop %v1021
    %v1023 = vmul.f32 %v1020, 1.442695
    %v1024 = vpow.pop %v1023
    %v1025 = vsel %vm204, %v1022, 0.0
    %1026 = vadd.xlane.f32.xlu0 %v1025
    %v1027 = vpop.xlane.xlu0 %1026
    %v1028 = vsel %vm204, %v1024, 0.0
    %1029 = vadd.xlane.f32.xlu0 %v1028
    %v1030 = vpop.xlane.xlu0 %1029
    %v1031 = vrcp.pop %v1027
    %v1032 = vrcp.pop %v1030
    %v1033 = vmul.f32 %v1022, %v1031
    %v1034 = vmul.f32 %v1024, %v1032
    %v1035 = vpack.c.bf16 %v1033, %v1033
    %v1036 = vpack.c.bf16 %v1034, %v1034
    %1037 = vrot.lane.b32.xlu0 %v199, 40
    %v1038 = vpop.permute.xlu0 %1037
    %v1040 = vsel %vm204, %v1035, 0
    %v1043 = vsel %vm345, %v1038, 0
    %1045 = vmatprep.subr.bf16.mxu0 0
    %1046 = vmatpush1.bf16.msra.mxu0 %v1043
    %1047 = vmatprep.subr.bf16.mxu0 0
    %1048 = vmatpush1.bf16.msra.mxu0 0
    %1049 = vmatprep.subr.bf16.mxu0 0
    %1050 = vmatpush1.bf16.msra.mxu0 0
    %1051 = vmatprep.subr.bf16.mxu0 0
    %1052 = vmatpush1.bf16.msra.mxu0 0
    %1053 = vmatprep.subr.bf16.mxu0 0
    %1054 = vmatpush1.bf16.msra.mxu0 0
    %1055 = vmatprep.subr.bf16.mxu0 0
    %1056 = vmatpush1.bf16.msra.mxu0 0
    %1057 = vmatprep.subr.bf16.mxu0 0
    %1058 = vmatpush1.bf16.msra.mxu0 0
    %1059 = vmatprep.subr.bf16.mxu0 0
    %1060 = vmatpush1.bf16.msra.mxu0 0
    %1061 = vmatprep.subr.bf16.mxu0 0
    %1062 = vmatpush1.bf16.msra.mxu0 0
    %1063 = vmatprep.subr.bf16.mxu0 0
    %1064 = vmatpush1.bf16.msra.mxu0 0
    %1065 = vmatprep.subr.bf16.mxu0 0
    %1066 = vmatpush1.bf16.msra.mxu0 0
    %1067 = vmatprep.subr.bf16.mxu0 0
    %1068 = vmatpush1.bf16.msra.mxu0 0
    %1069 = vmatprep.subr.bf16.mxu0 0
    %1070 = vmatpush1.bf16.msra.mxu0 0
    %1071 = vmatprep.subr.bf16.mxu0 0
    %1072 = vmatpush1.bf16.msra.mxu0 0
    %1073 = vmatprep.subr.bf16.mxu0 0
    %1074 = vmatpush1.bf16.msra.mxu0 0
    %1075 = vmatprep.subr.bf16.mxu0 0
    %1076 = vmatpush1.bf16.msra.mxu0 0
    %1077 = vmatprep.mubr.bf16.mxu0 0
    %1078 = vmatmul.mubr.bf16.gmra.mrb[0].mxu0 %v1040
    %v1079 = vpop.f32.mrb[0].mxu0
    %v1080 = vadd.f32 0.0, %v1079
    %v1081 = vpop.f32.mrb[0].mxu0
    %v1082 = vpop.f32.mrb[0].mxu0
    %v1083 = vpop.f32.mrb[0].mxu0
    %1084 = vdwg.mxu0
    %1085 = vrot.lane.b32.xlu0 %v200, 40
    %v1086 = vpop.permute.xlu0 %1085
    %v1088 = vsel %vm204, %v1036, 0
    %v1091 = vsel %vm345, %v1086, 0
    %1093 = vmatprep.subr.bf16.mxu0 0
    %1094 = vmatpush1.bf16.msra.mxu0 %v1091
    %1095 = vmatprep.subr.bf16.mxu0 0
    %1096 = vmatpush1.bf16.msra.mxu0 0
    %1097 = vmatprep.subr.bf16.mxu0 0
    %1098 = vmatpush1.bf16.msra.mxu0 0
    %1099 = vmatprep.subr.bf16.mxu0 0
    %1100 = vmatpush1.bf16.msra.mxu0 0
    %1101 = vmatprep.subr.bf16.mxu0 0
    %1102 = vmatpush1.bf16.msra.mxu0 0
    %1103 = vmatprep.subr.bf16.mxu0 0
    %1104 = vmatpush1.bf16.msra.mxu0 0
    %1105 = vmatprep.subr.bf16.mxu0 0
    %1106 = vmatpush1.bf16.msra.mxu0 0
    %1107 = vmatprep.subr.bf16.mxu0 0
    %1108 = vmatpush1.bf16.msra.mxu0 0
    %1109 = vmatprep.subr.bf16.mxu0 0
    %1110 = vmatpush1.bf16.msra.mxu0 0
    %1111 = vmatprep.subr.bf16.mxu0 0
    %1112 = vmatpush1.bf16.msra.mxu0 0
    %1113 = vmatprep.subr.bf16.mxu0 0
    %1114 = vmatpush1.bf16.msra.mxu0 0
    %1115 = vmatprep.subr.bf16.mxu0 0
    %1116 = vmatpush1.bf16.msra.mxu0 0
    %1117 = vmatprep.subr.bf16.mxu0 0
    %1118 = vmatpush1.bf16.msra.mxu0 0
    %1119 = vmatprep.subr.bf16.mxu0 0
    %1120 = vmatpush1.bf16.msra.mxu0 0
    %1121 = vmatprep.subr.bf16.mxu0 0
    %1122 = vmatpush1.bf16.msra.mxu0 0
    %1123 = vmatprep.subr.bf16.mxu0 0
    %1124 = vmatpush1.bf16.msra.mxu0 0
    %1125 = vmatprep.mubr.bf16.mxu0 0
    %1126 = vmatmul.mubr.bf16.gmra.mrb[0].mxu0 %v1088
    %v1127 = vpop.f32.mrb[0].mxu0
    %v1128 = vadd.f32 0.0, %v1127
    %v1129 = vpop.f32.mrb[0].mxu0
    %v1130 = vpop.f32.mrb[0].mxu0
    %v1131 = vpop.f32.mrb[0].mxu0
    %1132 = vdwg.mxu0
    %1135 = vrot.lane.b32.xlu0 %v1080, 24
    %v1136 = vpop.permute.xlu0 %1135
    %1137 = vrot.lane.b32.xlu0 %v1128, 24
    %v1138 = vpop.permute.xlu0 %1137
    %vm1141 = vcmask 261312
    %1142 = vst.msk [vmem:[#allocation2] sm:$0xff] %vm1141, %v1136
    %1143 = vst.msk [vmem:[#allocation2 + $0x8] sm:$0xff] %vm1141, %v1138
    %v1144 = vld [vmem:[#allocation2] sm:$0xff]
    %v1145 = vld [vmem:[#allocation2 + $0x8] sm:$0xff]
    %v1146 = vpack.c.bf16 %v1145, %v1144
    %v1147 = vld [vmem:[%s4] sm:$0xf]
    %v1148 = vld [vmem:[%s4 + $0x4] sm:$0xf]
    %v1149 = vld [vmem:[%s4 + $0x8] sm:$0xf]
    %v1150 = vld [vmem:[%s4 + $0xc] sm:$0xf]
    %v1151 = vld [vmem:[%s5] sm:$0x1]
    %v1153 = vlaneseq
    %v1154 = vshrl.u32 %v1153, 7
    %v1155 = vsub.s32 0, %v1154
    %v1156 = vrot.slane %v1151, %v1155
    %v1162 = vunpack.c.l.b16 %v1147
    %v1163 = vunpack.c.l.b16 %v1148
    %v1164 = vunpack.c.l.b16 %v1149
    %v1165 = vunpack.c.l.b16 %v1150
    %v1166 = vpack.c.b16 %v1163, %v1162
    %v1167 = vpack.c.b16 %v1165, %v1164
    %v1171 = vsel %vm73, %v1146, 0
    %1173 = vmatprep.subr.bf16.mxu0 0
    %1174 = vmatpush1.bf16.msra.mxu0 %v1166
    %1175 = vmatprep.subr.bf16.mxu0 0
    %1176 = vmatpush1.bf16.msra.mxu0 %v1167
    %1177 = vmatprep.subr.bf16.mxu0 0
    %1178 = vmatpush1.bf16.msra.mxu0 0
    %1179 = vmatprep.subr.bf16.mxu0 0
    %1180 = vmatpush1.bf16.msra.mxu0 0
    %1181 = vmatprep.subr.bf16.mxu0 0
    %1182 = vmatpush1.bf16.msra.mxu0 0
    %1183 = vmatprep.subr.bf16.mxu0 0
    %1184 = vmatpush1.bf16.msra.mxu0 0
    %1185 = vmatprep.subr.bf16.mxu0 0
    %1186 = vmatpush1.bf16.msra.mxu0 0
    %1187 = vmatprep.subr.bf16.mxu0 0
    %1188 = vmatpush1.bf16.msra.mxu0 0
    %1189 = vmatprep.subr.bf16.mxu0 0
    %1190 = vmatpush1.bf16.msra.mxu0 0
    %1191 = vmatprep.subr.bf16.mxu0 0
    %1192 = vmatpush1.bf16.msra.mxu0 0
    %1193 = vmatprep.subr.bf16.mxu0 0
    %1194 = vmatpush1.bf16.msra.mxu0 0
    %1195 = vmatprep.subr.bf16.mxu0 0
    %1196 = vmatpush1.bf16.msra.mxu0 0
    %1197 = vmatprep.subr.bf16.mxu0 0
    %1198 = vmatpush1.bf16.msra.mxu0 0
    %1199 = vmatprep.subr.bf16.mxu0 0
    %1200 = vmatpush1.bf16.msra.mxu0 0
    %1201 = vmatprep.subr.bf16.mxu0 0
    %1202 = vmatpush1.bf16.msra.mxu0 0
    %1203 = vmatprep.subr.bf16.mxu0 0
    %1204 = vmatpush1.bf16.msra.mxu0 0
    %1205 = vmatprep.mubr.bf16.mxu0 0
    %1206 = vmatmul.mubr.bf16.gmra.mrb[0].mxu0 %v1171
    %v1207 = vpop.f32.mrb[0].mxu0
    %v1208 = vadd.f32 %v1156, %v1207
    %v1209 = vpop.f32.mrb[0].mxu0
    %v1210 = vpop.f32.mrb[0].mxu0
    %v1211 = vadd.f32 %v1156, %v1210
    %v1212 = vpop.f32.mrb[0].mxu0
    %1213 = vdwg.mxu0
    %v1214 = vadd.f32 %v63, %v1208
    %v1215 = vadd.f32 %v64, %v1211
    %v1216 = vld [vmem:[%s12] sm:$0x1]
    %v1217 = vld [vmem:[%s13] sm:$0x1]
    %v1218 = vsel %vm73, %v1214, 0.0
    %1219 = vadd.xlane.f32.xlu0 %v1218
    %v1220 = vpop.xlane.xlu0 %1219
    %v1221 = vsel %vm73, %v1215, 0.0
    %1222 = vadd.xlane.f32.xlu0 %v1221
    %v1223 = vpop.xlane.xlu0 %1222
    %v1224 = vmul.f32 %v1220, %v80
    %v1225 = vmul.f32 %v1223, %v80
    %v1226 = vsub.f32 %v1214, %v1224
    %v1227 = vsub.f32 %v1215, %v1225
    %v1228 = vmul.f32 %v1226, %v1226
    %v1229 = vmul.f32 %v1227, %v1227
    %v1230 = vsel %vm73, %v1228, 0.0
    %1231 = vadd.xlane.f32.xlu0 %v1230
    %v1232 = vpop.xlane.xlu0 %1231
    %v1233 = vsel %vm73, %v1229, 0.0
    %1234 = vadd.xlane.f32.xlu0 %v1233
    %v1235 = vpop.xlane.xlu0 %1234
    %v1236 = vmul.f32 %v1232, 0.032258064
    %v1237 = vmul.f32 %v1235, 0.032258064
    %v1238 = vrsqrt.pop %v1236
    %v1239 = vmul.f32 %v1236, %v1238
    %vm1240 = vcmp.eq.f32.partialorder %v1236, inf
    %v1241 = vsel %vm1240, %v1236, %v1239
    %vm1242 = vcmp.eq.f32.partialorder %v1236, 0.0
    %v1243 = vand.u32 %v1236, 2147483648
    %v1244 = vsel %vm1242, %v1243, %v1241
    %v1245 = vrsqrt.pop %v1237
    %v1246 = vmul.f32 %v1237, %v1245
    %vm1247 = vcmp.eq.f32.partialorder %v1237, inf
    %v1248 = vsel %vm1247, %v1237, %v1246
    %vm1249 = vcmp.eq.f32.partialorder %v1237, 0.0
    %v1250 = vand.u32 %v1237, 2147483648
    %v1251 = vsel %vm1249, %v1250, %v1248
    %v1252 = vadd.f32 %v1244, 1e-06
    %v1253 = vadd.f32 %v1251, 1e-06
    %v1254 = vrcp.pop %v1252
    %v1255 = vrcp.pop %v1253
    %v1257 = vlaneseq
    %v1258 = vshrl.u32 %v1257, 7
    %v1259 = vsub.s32 0, %v1258
    %v1260 = vrot.slane %v1216, %v1259
    %v1262 = vmul.f32 %v1260, %v1226
    %v1263 = vmul.f32 %v1260, %v1227
    %v1264 = vmul.f32 %v1262, %v1254
    %v1265 = vmul.f32 %v1263, %v1255
    %v1267 = vlaneseq
    %v1268 = vshrl.u32 %v1267, 7
    %v1269 = vsub.s32 0, %v1268
    %v1270 = vrot.slane %v1217, %v1269
    %v1272 = vadd.f32 %v1264, %v1270
    %v1273 = vadd.f32 %v1265, %v1270
    %v1274 = vpack.c.bf16 %v1273, %v1272
    %v1275 = vld [vmem:[#allocation3] sm:$0xf]
    %v1276 = vld [vmem:[#allocation3 + $0x4] sm:$0xf]
    %v1277 = vld [vmem:[#allocation3 + $0x8] sm:$0xf]
    %v1278 = vld [vmem:[#allocation3 + $0xc] sm:$0xf]
    %v1279 = vld [vmem:[%s7] sm:$0x1]
    %v1281 = vlaneseq
    %v1282 = vshrl.u32 %v1281, 7
    %v1283 = vsub.s32 0, %v1282
    %v1284 = vrot.slane %v1279, %v1283
    %v1290 = vunpack.c.l.b16 %v1275
    %v1291 = vunpack.c.l.b16 %v1276
    %v1292 = vunpack.c.l.b16 %v1277
    %v1293 = vunpack.c.l.b16 %v1278
    %v1294 = vpack.c.b16 %v1291, %v1290
    %v1295 = vpack.c.b16 %v1293, %v1292
    %v1299 = vsel %vm73, %v1274, 0
    %1301 = vmatprep.subr.bf16.mxu0 0
    %1302 = vmatpush1.bf16.msra.mxu0 %v1294
    %1303 = vmatprep.subr.bf16.mxu0 0
    %1304 = vmatpush1.bf16.msra.mxu0 %v1295
    %1305 = vmatprep.subr.bf16.mxu0 0
    %1306 = vmatpush1.bf16.msra.mxu0 0
    %1307 = vmatprep.subr.bf16.mxu0 0
    %1308 = vmatpush1.bf16.msra.mxu0 0
    %1309 = vmatprep.subr.bf16.mxu0 0
    %1310 = vmatpush1.bf16.msra.mxu0 0
    %1311 = vmatprep.subr.bf16.mxu0 0
    %1312 = vmatpush1.bf16.msra.mxu0 0
    %1313 = vmatprep.subr.bf16.mxu0 0
    %1314 = vmatpush1.bf16.msra.mxu0 0
    %1315 = vmatprep.subr.bf16.mxu0 0
    %1316 = vmatpush1.bf16.msra.mxu0 0
    %1317 = vmatprep.subr.bf16.mxu0 0
    %1318 = vmatpush1.bf16.msra.mxu0 0
    %1319 = vmatprep.subr.bf16.mxu0 0
    %1320 = vmatpush1.bf16.msra.mxu0 0
    %1321 = vmatprep.subr.bf16.mxu0 0
    %1322 = vmatpush1.bf16.msra.mxu0 0
    %1323 = vmatprep.subr.bf16.mxu0 0
    %1324 = vmatpush1.bf16.msra.mxu0 0
    %1325 = vmatprep.subr.bf16.mxu0 0
    %1326 = vmatpush1.bf16.msra.mxu0 0
    %1327 = vmatprep.subr.bf16.mxu0 0
    %1328 = vmatpush1.bf16.msra.mxu0 0
    %1329 = vmatprep.subr.bf16.mxu0 0
    %1330 = vmatpush1.bf16.msra.mxu0 0
    %1331 = vmatprep.subr.bf16.mxu0 0
    %1332 = vmatpush1.bf16.msra.mxu0 0
    %1333 = vmatprep.mubr.bf16.mxu0 0
    %1334 = vmatmul.mubr.bf16.gmra.mrb[0].mxu0 %v1299
    %v1335 = vpop.f32.mrb[0].mxu0
    %v1336 = vadd.f32 %v1284, %v1335
    %v1337 = vpop.f32.mrb[0].mxu0
    %v1338 = vpop.f32.mrb[0].mxu0
    %v1339 = vadd.f32 %v1284, %v1338
    %v1340 = vpop.f32.mrb[0].mxu0
    %1341 = vdwg.mxu0
    %v1342 = vmax.f32 %v1336, 0.0
    %v1343 = vmax.f32 %v1339, 0.0
    %v1344 = vpack.c.bf16 %v1343, %v1342
    %v1345 = vld [vmem:[%s8] sm:$0xf]
    %v1346 = vld [vmem:[%s8 + $0x4] sm:$0xf]
    %v1347 = vld [vmem:[%s8 + $0x8] sm:$0xf]
    %v1348 = vld [vmem:[%s8 + $0xc] sm:$0xf]
    %v1349 = vld [vmem:[%s8 + $0x10] sm:$0xf]
    %v1350 = vld [vmem:[%s8 + $0x14] sm:$0xf]
    %v1351 = vld [vmem:[%s8 + $0x18] sm:$0xf]
    %v1352 = vld [vmem:[%s8 + $0x1c] sm:$0xf]
    %v1353 = vld [vmem:[%s9] sm:$0x1]
    %v1355 = vlaneseq
    %v1356 = vshrl.u32 %v1355, 7
    %v1357 = vsub.s32 0, %v1356
    %v1358 = vrot.slane %v1353, %v1357
    %v1368 = vunpack.c.l.b16 %v1345
    %v1369 = vunpack.c.l.b16 %v1346
    %v1370 = vunpack.c.l.b16 %v1347
    %v1371 = vunpack.c.l.b16 %v1348
    %v1372 = vunpack.c.l.b16 %v1349
    %v1373 = vunpack.c.l.b16 %v1350
    %v1374 = vunpack.c.l.b16 %v1351
    %v1375 = vunpack.c.l.b16 %v1352
    %v1376 = vpack.c.b16 %v1369, %v1368
    %v1377 = vpack.c.b16 %v1371, %v1370
    %v1378 = vpack.c.b16 %v1373, %v1372
    %v1379 = vpack.c.b16 %v1375, %v1374
    %vm1384 = vcmask 523264
    %v1386 = vsel %vm1384, %v1344, 0
    %1388 = vmatprep.subr.bf16.mxu0 0
    %1389 = vmatpush1.bf16.msra.mxu0 %v1376
    %1390 = vmatprep.subr.bf16.mxu0 0
    %1391 = vmatpush1.bf16.msra.mxu0 %v1377
    %1392 = vmatprep.subr.bf16.mxu0 0
    %1393 = vmatpush1.bf16.msra.mxu0 %v1378
    %1394 = vmatprep.subr.bf16.mxu0 0
    %1395 = vmatpush1.bf16.msra.mxu0 %v1379
    %1396 = vmatprep.subr.bf16.mxu0 0
    %1397 = vmatpush1.bf16.msra.mxu0 0
    %1398 = vmatprep.subr.bf16.mxu0 0
    %1399 = vmatpush1.bf16.msra.mxu0 0
    %1400 = vmatprep.subr.bf16.mxu0 0
    %1401 = vmatpush1.bf16.msra.mxu0 0
    %1402 = vmatprep.subr.bf16.mxu0 0
    %1403 = vmatpush1.bf16.msra.mxu0 0
    %1404 = vmatprep.subr.bf16.mxu0 0
    %1405 = vmatpush1.bf16.msra.mxu0 0
    %1406 = vmatprep.subr.bf16.mxu0 0
    %1407 = vmatpush1.bf16.msra.mxu0 0
    %1408 = vmatprep.subr.bf16.mxu0 0
    %1409 = vmatpush1.bf16.msra.mxu0 0
    %1410 = vmatprep.subr.bf16.mxu0 0
    %1411 = vmatpush1.bf16.msra.mxu0 0
    %1412 = vmatprep.subr.bf16.mxu0 0
    %1413 = vmatpush1.bf16.msra.mxu0 0
    %1414 = vmatprep.subr.bf16.mxu0 0
    %1415 = vmatpush1.bf16.msra.mxu0 0
    %1416 = vmatprep.subr.bf16.mxu0 0
    %1417 = vmatpush1.bf16.msra.mxu0 0
    %1418 = vmatprep.subr.bf16.mxu0 0
    %1419 = vmatpush1.bf16.msra.mxu0 0
    %1420 = vmatprep.mubr.bf16.mxu0 0
    %1421 = vmatmul.mubr.bf16.gmra.mrb[0].mxu0 %v1386
    %v1422 = vpop.f32.mrb[0].mxu0
    %v1423 = vadd.f32 %v1358, %v1422
    %v1424 = vpop.f32.mrb[0].mxu0
    %v1425 = vpop.f32.mrb[0].mxu0
    %v1426 = vadd.f32 %v1358, %v1425
    %v1427 = vpop.f32.mrb[0].mxu0
    %1428 = vdwg.mxu0
    %v1429 = vadd.f32 %v1214, %v1423
    %v1430 = vadd.f32 %v1215, %v1426
    %1431 = vst.msk [vmem:[#allocation6] sm:$0xff] %vm73, %v1429
    %1432 = vst.msk [vmem:[#allocation6 + $0x8] sm:$0xff] %vm73, %v1430
    // Predicated region
    $region62: #{tpu_custom_call.1} parent=1 // pred_check
      _
    $region63: #{tpu_custom_call.1} parent=1 // pred_check_branch
      %1434 = sbr.rel (0) target = $region65
    $region64: #{tpu_custom_call.1} parent=1 // pred_region
      %s1436 = ssub.s32 256, 256
      %1437 = vsyncadd [#allocation5], %s1436
      %s1438 = sshll.u32 [#allocation6], 4
      %s1439 = int_to_ptr.vmem [resolvable:$true] %s1438
      %1444 = dma.vmem_to_hbm [thread:$0]  %s1439, 256, %s14, [#allocation5], 128, 128, 8
    $region65: #{tpu_custom_call.1} parent=1 // pred_fallthru
      _
    // Predicated region
    $region66: #{tpu_custom_call.1} parent=1 // pred_check
      _
    $region67: #{tpu_custom_call.1} parent=1 // pred_check_branch
      %1446 = sbr.rel (0) target = $region69
    $region68: #{tpu_custom_call.1} parent=1 // pred_region
      %1447 = dma.done [#allocation5], 256
    $region69: #{tpu_custom_call.1} parent=1 // pred_fallthru
      _
    %1448 = vsyncpa [#allocation4], 1
    %1449 = vsyncpa [#allocation5], 1

</llo_original>
